<compile_context>
chip_gen: v7x
topology: tpu7x:2x2x1
jax: 0.10.0
libtpu: 0.0.40
codegen_flags: <defaults>
</compile_context>

<pallas_src>
import math
import functools

import jax
import jax.numpy as jnp
from jax import lax
from jax.experimental import pallas as pl
from jax.experimental.pallas import tpu as pltpu


# ----------------------------- small config (ModelArgs analogue) -----------------------------
class Cfg:
    max_batch_size = 2
    max_seq_len = 16
    vocab_size = 128
    dim = 64
    inter_dim = 96
    moe_inter_dim = 32
    n_layers = 2
    n_dense_layers = 1          # layer 0 dense MLP, layer 1 MoE
    n_heads = 2
    n_routed_experts = 4
    n_shared_experts = 1
    n_activated_experts = 2
    n_expert_groups = 1
    n_limited_groups = 1
    score_func = "softmax"
    route_scale = 1.0
    q_lora_rank = 0
    kv_lora_rank = 32
    qk_nope_head_dim = 16
    qk_rope_head_dim = 8
    v_head_dim = 16
    original_seq_len = 32
    rope_theta = 10000.0
    rope_factor = 40.0
    beta_fast = 32
    beta_slow = 1
    mscale = 1.0
    attn_impl = "absorb"


EPS = 1e-6
COMPUTE_DTYPE = jnp.bfloat16     # weights / activations; all matmuls accumulate in f32
NEG_INF = -1e30                  # finite large-negative mask (robust vs -inf rows)
VMEM_LIMIT = 32 * 1024 * 1024    # explicit scoped-VMEM budget (safe on v5e/v6e/v7x)


# ----------------------------- fused attention-block kernel -----------------------------
def _attn_block_kernel(dims, scale,
                       x_ref, anw_ref, wqkv_ref, cos_ref, a_ref, b_ref,
                       kvw_ref, wscore_ref, wovo_ref, fnw_ref, out_ref):
    H, Dn, Dr, C, Dv, D, S = dims
    nq, nr = H * Dn, H * Dr
    CD = C + Dr
    M = x_ref.shape[0]

    x = x_ref[...].astype(jnp.float32)                       # (M, D) residual stream

    # attention RMSNorm (f32 elementwise math, bf16 matmul operands)
    ms = jnp.mean(x * x, axis=-1, keepdims=True)
    xn = (x * lax.rsqrt(ms + EPS) * anw_ref[...]).astype(COMPUTE_DTYPE)

    # fused projection: columns = [q_nope(H*Dn) | q_rope(H*Dr) | kv(C) | k_pe(Dr) | 0-pad]
    qkv = jnp.dot(xn, wqkv_ref[...], preferred_element_type=jnp.float32)   # (M, WQ)
    WQ = qkv.shape[1]

    # RoPE on interleaved (real, imag) pairs via XLU rolls + precomputed signed sin tables:
    #   y = x*cos + roll(x, -1)*(-sin on even rope lanes) + roll(x, +1)*(+sin on odd rope lanes)
    # cos==1 / sin==0 outside the rope columns, so this leaves q_nope / kv / pad untouched.
    qkv = (qkv * cos_ref[...]
           + pltpu.roll(qkv, WQ - 1, 1) * a_ref[...]
           + pltpu.roll(qkv, 1, 1) * b_ref[...])

    q_slab = qkv[:, :nq + nr].astype(COMPUTE_DTYPE)          # [q_nope | q_pe(rotated)]
    kvpe = qkv[:, nq + nr:nq + nr + CD]                      # [kv | k_pe(rotated)]

    # kv RMSNorm applied only to the first C lanes (k_pe passes through)
    kv_ms = jnp.mean(kvpe[:, :C] * kvpe[:, :C], axis=-1, keepdims=True)
    lane = lax.broadcasted_iota(jnp.int32, (M, CD), 1)
    kv_scale = jnp.where(lane < C, lax.rsqrt(kv_ms + EPS), 1.0) * kvw_ref[...]
    k_score = (kvpe * kv_scale).astype(COMPUTE_DTYPE)        # (M, C+Dr) keys for all heads

    # one fused projection to score space: per head gives [q_abs(C) | q_pe(Dr)] contiguous
    q_score = jnp.dot(q_slab, wscore_ref[...],
                      preferred_element_type=jnp.float32).astype(COMPUTE_DTYPE)   # (M, H*CD)

    # causal + same-batch mask built in-register (no O(M^2) HBM input)
    r = lax.broadcasted_iota(jnp.int32, (M, M), 0)
    c = lax.broadcasted_iota(jnp.int32, (M, M), 1)
    if (S & (S - 1)) == 0:
        sh = S.bit_length() - 1
        rb = lax.shift_right_logical(r, sh)
        cb = lax.shift_right_logical(c, sh)
    else:
        rb = r // S
        cb = c // S
    ok = (c <= r) & (rb == cb)
    mask = jnp.where(ok, 0.0, NEG_INF)

    kvn = k_score[:, :C]
    wovo = wovo_ref[...]                                     # (H*C, D), wkv_b(v)@wo folded
    acc = jnp.zeros((M, D), jnp.float32)
    for h in range(H):                                       # heads unrolled (small H)
        qh = q_score[:, h * CD:(h + 1) * CD]                 # (M, C+Dr)
        s = lax.dot_general(qh, k_score, (((1,), (1,)), ((), ())),
                            preferred_element_type=jnp.float32)
        s = s * scale + mask
        mmax = jnp.max(s, axis=-1, keepdims=True)
        p = jnp.exp(s - mmax)
        l = jnp.sum(p, axis=-1, keepdims=True)
        p = p * pl.reciprocal(l, approx=True)                # EUP reciprocal (free slot)
        o_c = jnp.dot(p.astype(COMPUTE_DTYPE), kvn,
                      preferred_element_type=jnp.float32)    # (M, C)
        acc = acc + jnp.dot(o_c.astype(COMPUTE_DTYPE), wovo[h * C:(h + 1) * C, :],
                            preferred_element_type=jnp.float32)   # (M, D)

    h_new = x + acc
    ms2 = jnp.mean(h_new * h_new, axis=-1, keepdims=True)
    ffn_in = h_new * lax.rsqrt(ms2 + EPS) * fnw_ref[...]
    # single lane-dense (M, 2*D) store: [:, :D] = new residual, [:, D:] = ffn-normed input
    out_ref[...] = jnp.concatenate(
        [h_new.astype(out_ref.dtype), ffn_in.astype(out_ref.dtype)], axis=-1)


def attn_block_pallas(x, lp, cos_t, a_t, b_t, cfg, scale, S):
    # TODO(synk): single grid=(1,) step over all tokens (keys need the full chunk); split the
    # query dim across a parallel grid axis (v7x 2 TCs) once kv is produced by its own kernel.
    M, D = x.shape
    H, Dn, Dr = cfg.n_heads, cfg.qk_nope_head_dim, cfg.qk_rope_head_dim
    C, Dv = cfg.kv_lora_rank, cfg.v_head_dim
    a = lp["attn"]
    full = lambda arr: pl.BlockSpec(arr.shape, lambda i: (0, 0))
    return pl.pallas_call(
        functools.partial(_attn_block_kernel, (H, Dn, Dr, C, Dv, D, S), scale),
        out_shape=jax.ShapeDtypeStruct((M, 2 * D), COMPUTE_DTYPE),
        grid=(1,),
        in_specs=[full(x), full(lp["attn_norm_w"]), full(a["w_qkv_t"]),
                  full(cos_t), full(a_t), full(b_t),
                  full(a["kvw_ext"]), full(a["w_score"]), full(a["w_ovo"]),
                  full(lp["ffn_norm_w"])],
        out_specs=pl.BlockSpec((M, 2 * D), lambda i: (0, 0)),
        compiler_params=pltpu.CompilerParams(
            dimension_semantics=("arbitrary",), vmem_limit_bytes=VMEM_LIMIT),
    )(x, lp["attn_norm_w"], a["w_qkv_t"], cos_t, a_t, b_t,
      a["kvw_ext"], a["w_score"], a["w_ovo"], lp["ffn_norm_w"])


# ----------------------------- fused dense FFN kernel (norm input + MLP + residual) -----------
def _dense_mlp_kernel(D, I, hc_ref, w13_ref, w2_ref, out_ref):
    resid = hc_ref[:, :D].astype(jnp.float32)
    xin = hc_ref[:, D:]
    h13 = jnp.dot(xin, w13_ref[...], preferred_element_type=jnp.float32)   # fused w1|w3
    h1 = h13[:, :I]
    hmid = (h1 * jax.nn.sigmoid(h1) * h13[:, I:]).astype(COMPUTE_DTYPE)    # silu(w1x)*w3x
    y = jnp.dot(hmid, w2_ref[...], preferred_element_type=jnp.float32)
    out_ref[...] = (resid + y).astype(out_ref.dtype)


def dense_mlp_pallas(hcomb, ffn, D):
    M, twoD = hcomb.shape
    I = ffn["w13_t"].shape[1] // 2
    TM = 8 if M % 8 == 0 else M
    mt = M // TM
    return pl.pallas_call(
        functools.partial(_dense_mlp_kernel, D, I),
        out_shape=jax.ShapeDtypeStruct((M, D), COMPUTE_DTYPE),
        grid=(mt,),
        in_specs=[pl.BlockSpec((TM, twoD), lambda m: (m, 0)),
                  pl.BlockSpec(ffn["w13_t"].shape, lambda m: (0, 0)),
                  pl.BlockSpec(ffn["w2_t"].shape, lambda m: (0, 0))],
        out_specs=pl.BlockSpec((TM, D), lambda m: (m, 0)),
        compiler_params=pltpu.CompilerParams(
            dimension_semantics=("parallel",), vmem_limit_bytes=VMEM_LIMIT),
    )(hcomb, ffn["w13_t"], ffn["w2_t"])


# --------------- fused MoE kernel: grid (M tiles "parallel", experts "arbitrary") ---------------
def _moe_kernel(D, I, active_ref, hc_ref, w13_ref, w2_ref, dw_ref, out_ref, acc_ref):
    m = pl.program_id(0)
    e = pl.program_id(1)

    @pl.when(e == 0)
    def _():
        acc_ref[...] = hc_ref[:, :D].astype(jnp.float32)              # init with residual

    @pl.when(active_ref[m, e] > 0)                                    # skip unrouted experts
    def _():
        xin = hc_ref[:, D:]                                           # ffn-normed tokens
        h13 = jnp.dot(xin, w13_ref[...], preferred_element_type=jnp.float32)
        h1 = h13[:, :I]
        hmid = (h1 * jax.nn.sigmoid(h1) * h13[:, I:]).astype(COMPUTE_DTYPE)
        y = jnp.dot(hmid, w2_ref[...], preferred_element_type=jnp.float32)
        # lane-dense routing weights (TM, E+1): pick column e without a dynamic lane index
        lane = lax.broadcasted_iota(jnp.int32, dw_ref.shape, 1)
        w_col = jnp.sum(jnp.where(lane == e, dw_ref[...], 0.0), axis=-1, keepdims=True)
        acc_ref[...] += y * w_col

    @pl.when(e == pl.num_programs(1) - 1)
    def _():
        out_ref[...] = acc_ref[...].astype(out_ref.dtype)


def moe_pallas(hcomb, ffn, dw, D):
    # TODO(synk): at production scale replace dense per-expert compute with a scalar-prefetch
    # group-GEMM (per-expert token offsets) so FLOPs/DMA are proportional to routed tokens.
    M, twoD = hcomb.shape
    Eall, _, I2 = ffn["w13_stack"].shape
    I = I2 // 2
    TM = 8 if M % 8 == 0 else M
    mt = M // TM
    active = (dw.reshape(mt, TM, Eall) > 0.0).any(axis=1).astype(jnp.int32)   # (mt, E+1)
    gs = pltpu.PrefetchScalarGridSpec(
        num_scalar_prefetch=1,
        grid=(mt, Eall),
        in_specs=[pl.BlockSpec((TM, twoD), lambda m, e, act: (m, 0)),
                  pl.BlockSpec((None, D, I2), lambda m, e, act: (e, 0, 0)),
                  pl.BlockSpec((None, I, D), lambda m, e, act: (e, 0, 0)),
                  pl.BlockSpec((TM, Eall), lambda m, e, act: (m, 0))],
        out_specs=pl.BlockSpec((TM, D), lambda m, e, act: (m, 0)),
        scratch_shapes=[pltpu.VMEM((TM, D), jnp.float32)])
    return pl.pallas_call(
        functools.partial(_moe_kernel, D, I),
        out_shape=jax.ShapeDtypeStruct((M, D), COMPUTE_DTYPE),
        grid_spec=gs,
        compiler_params=pltpu.CompilerParams(
            dimension_semantics=("parallel", "arbitrary"),
            vmem_limit_bytes=VMEM_LIMIT),
    )(active, hcomb, ffn["w13_stack"], ffn["w2_stack"], dw)


# --------------------- final norm + lm-head (last token only, vocab-tiled) ---------------------
def _final_kernel(h_ref, nw_ref, head_ref, out_ref):
    x = h_ref[...].astype(jnp.float32)
    ms = jnp.mean(x * x, axis=-1, keepdims=True)
    xn = (x * lax.rsqrt(ms + EPS) * nw_ref[...]).astype(COMPUTE_DTYPE)
    out_ref[...] = jnp.dot(xn, head_ref[...], preferred_element_type=jnp.float32)


def final_head_pallas(h_last, norm_w, head_t):
    Bn, D = h_last.shape
    V = head_t.shape[1]
    TV = 128 if V % 128 == 0 else V
    vt = V // TV
    return pl.pallas_call(
        _final_kernel,
        out_shape=jax.ShapeDtypeStruct((Bn, V), jnp.float32),
        grid=(vt,),
        in_specs=[pl.BlockSpec((Bn, D), lambda v: (0, 0)),
                  pl.BlockSpec((1, D), lambda v: (0, 0)),
                  pl.BlockSpec((D, TV), lambda v: (0, v))],
        out_specs=pl.BlockSpec((Bn, TV), lambda v: (0, v)),
        compiler_params=pltpu.CompilerParams(
            dimension_semantics=("parallel",), vmem_limit_bytes=VMEM_LIMIT),
    )(h_last, norm_w, head_t)


# ----------------------------- glue (rope tables, gate, model wiring) -----------------------------
def precompute_freqs_cis(cfg):
    dim = cfg.qk_rope_head_dim
    seqlen = cfg.max_seq_len
    base = cfg.rope_theta
    freqs = 1.0 / (base ** (jnp.arange(0, dim, 2, dtype=jnp.float32) / dim))
    if seqlen > cfg.original_seq_len:  # YaRN correction branch (inactive at this config)
        def corr(num_rot):
            return dim * math.log(cfg.original_seq_len / (num_rot * 2 * math.pi)) / (2 * math.log(base))
        low = max(math.floor(corr(cfg.beta_fast)), 0)
        high = min(math.ceil(corr(cfg.beta_slow)), dim - 1)
        if low == high:
            high = high + 0.001
        ramp = jnp.clip((jnp.arange(dim // 2, dtype=jnp.float32) - low) / (high - low), 0, 1)
        smooth = 1 - ramp
        freqs = freqs / cfg.rope_factor * (1 - smooth) + freqs * smooth
    t = jnp.arange(seqlen, dtype=jnp.float32)
    freqs = jnp.outer(t, freqs)                 # (seqlen, dim//2)
    return jnp.cos(freqs), jnp.sin(freqs)


def gate_dense_weights(ffn_in, gate_w_t, cfg):
    # TODO(synk): top-k routing has no clean Mosaic lowering; gate stays in plain JAX
    # (tiny (M, E) problem). Result is densified, lane-dense (M, E+1): per-token per-expert
    # weight, 0 if not routed, plus a trailing column of 1.0 for the shared expert.
    scores = jnp.dot(ffn_in.astype(jnp.float32), gate_w_t)            # (M, E)
    probs = jax.nn.softmax(scores, axis=-1)                           # score_func == softmax
    weights, indices = lax.top_k(probs, cfg.n_activated_experts)
    weights = weights * cfg.route_scale
    onehot = jax.nn.one_hot(indices, cfg.n_routed_experts, dtype=jnp.float32)
    dense = jnp.sum(onehot * weights[..., None], axis=1)              # (M, E)
    ones = jnp.ones((dense.shape[0], 1), jnp.float32)
    return jnp.concatenate([dense, ones], axis=1)                     # (M, E+1)


def transformer_forward(params, tokens, cfg, start_pos=0):
    # TODO(synk): prefill-only (start_pos=0); no KV cache / decode path.
    B, S = tokens.shape
    M = B * S
    D, H = cfg.dim, cfg.n_heads
    Dn, Dr, C = cfg.qk_nope_head_dim, cfg.qk_rope_head_dim, cfg.kv_lora_rank
    nq, nr = H * Dn, H * Dr
    kpe0 = nq + nr + C
    WQ = params["layers"][0]["attn"]["w_qkv_t"].shape[1]

    h = jnp.take(params["embed"], tokens.reshape(-1), axis=0)         # (M, D) bf16

    # RoPE tables for the fused qkv slab: cos (1 outside rope cols), signed sin split by
    # pair parity so the kernel only needs two pltpu.roll's + three multiplies.
    c2 = jnp.repeat(params["freqs_cos"][start_pos:start_pos + S], 2, axis=-1)   # (S, Dr)
    s2 = jnp.repeat(params["freqs_sin"][start_pos:start_pos + S], 2, axis=-1)
    even = (jnp.arange(Dr) % 2 == 0).astype(jnp.float32)
    a_head = -s2 * even                                                # even lanes: -sin
    b_head = s2 * (1.0 - even)                                         # odd lanes:  +sin
    cos_full = jnp.ones((S, WQ), jnp.float32)
    a_full = jnp.zeros((S, WQ), jnp.float32)
    b_full = jnp.zeros((S, WQ), jnp.float32)
    cos_full = cos_full.at[:, nq:nq + nr].set(jnp.tile(c2, (1, H)))
    cos_full = cos_full.at[:, kpe0:kpe0 + Dr].set(c2)
    a_full = a_full.at[:, nq:nq + nr].set(jnp.tile(a_head, (1, H)))
    a_full = a_full.at[:, kpe0:kpe0 + Dr].set(a_head)
    b_full = b_full.at[:, nq:nq + nr].set(jnp.tile(b_head, (1, H)))
    b_full = b_full.at[:, kpe0:kpe0 + Dr].set(b_head)
    cos_t = jnp.tile(cos_full, (B, 1))                                 # (M, WQ)
    a_t = jnp.tile(a_full, (B, 1))
    b_t = jnp.tile(b_full, (B, 1))

    qk_head_dim = cfg.qk_nope_head_dim + cfg.qk_rope_head_dim
    scale = qk_head_dim ** (-0.5)
    if cfg.max_seq_len > cfg.original_seq_len:
        m_ = 0.1 * cfg.mscale * math.log(cfg.rope_factor) + 1.0
        scale = scale * m_ * m_

    for layer_id, lp in enumerate(params["layers"]):
        hcomb = attn_block_pallas(h, lp, cos_t, a_t, b_t, cfg, scale, S)
        if layer_id < cfg.n_dense_layers:
            h = dense_mlp_pallas(hcomb, lp["ffn"], D)
        else:
            dw = gate_dense_weights(hcomb[:, D:], lp["ffn"]["gate_w_t"], cfg)
            h = moe_pallas(hcomb, lp["ffn"], dw, D)

    # slice last token BEFORE final norm / lm-head (RMSNorm is per-token, so equivalent)
    h_last = h.reshape(B, S, D)[:, -1]                                 # (B, D)
    return final_head_pallas(h_last, params["norm_w"], params["head_t"])  # (B, V) f32


# ----------------------------- deterministic parameter init -----------------------------
def init_params(key, cfg):
    keys = iter(jax.random.split(key, 256))

    def xavier(out_f, in_f):
        std = math.sqrt(2.0 / (in_f + out_f))
        return jax.random.normal(next(keys), (out_f, in_f), jnp.float32) * std

    D, H = cfg.dim, cfg.n_heads
    Dn, Dr, C, Dv = cfg.qk_nope_head_dim, cfg.qk_rope_head_dim, cfg.kv_lora_rank, cfg.v_head_dim
    qk_head_dim = Dn + Dr
    nq, nr = H * Dn, H * Dr
    CD = C + Dr
    assert Dr % 2 == 0

    params = {"embed": jax.random.normal(next(keys), (cfg.vocab_size, D),
                                         jnp.float32).astype(COMPUTE_DTYPE)}
    layers = []
    for layer_id in range(cfg.n_layers):
        # reorder wq rows into [all-heads nope | all-heads rope] and fuse with wkv_a;
        # pad the fused projection output width to a 128-lane multiple (zero columns).
        wq = xavier(H * qk_head_dim, D).reshape(H, qk_head_dim, D)
        wq_nope = wq[:, :Dn, :].reshape(nq, D)
        wq_rope = wq[:, Dn:, :].reshape(nr, D)
        wkv_a = xavier(C + Dr, D)
        w_qkv = jnp.concatenate([wq_nope, wq_rope, wkv_a], axis=0)     # (nq+nr+C+Dr, D)
        total = nq + nr + C + Dr
        WQ = ((total + 127) // 128) * 128
        if WQ > total:
            w_qkv = jnp.concatenate([w_qkv, jnp.zeros((WQ - total, D), jnp.float32)], axis=0)

        # wkv_b: nope part packed block-diagonally (plus identity pass-through for q_pe) so
        # one matmul yields [q_abs_h | q_pe_h] per head; v part folded with wo at init.
        wkv_b = xavier(H * (Dn + Dv), C).reshape(H, Dn + Dv, C)
        w_score = jnp.zeros((nq + nr, H * CD), jnp.float32)
        eye_dr = jnp.eye(Dr, dtype=jnp.float32)
        for hh in range(H):
            w_score = w_score.at[hh * Dn:(hh + 1) * Dn,
                                 hh * CD:hh * CD + C].set(wkv_b[hh, :Dn, :])
            w_score = w_score.at[nq + hh * Dr:nq + (hh + 1) * Dr,
                                 hh * CD + C:(hh + 1) * CD].set(eye_dr)
        wo_t = xavier(D, H * Dv).T                                      # (H*Dv, D)
        w_ovo = jnp.concatenate(
            [wkv_b[hh, Dn:, :].T @ wo_t[hh * Dv:(hh + 1) * Dv, :] for hh in range(H)],
            axis=0)                                                     # (H*C, D)
        kv_norm_w = jnp.ones((1, C), jnp.float32)
        attn = {
            "w_qkv_t": w_qkv.T.astype(COMPUTE_DTYPE),                   # (D, WQ)
            "kvw_ext": jnp.concatenate([kv_norm_w, jnp.ones((1, Dr), jnp.float32)], axis=1),
            "w_score": w_score.astype(COMPUTE_DTYPE),                   # (nq+nr, H*(C+Dr))
            "w_ovo": w_ovo.astype(COMPUTE_DTYPE),                       # (H*C, D)
        }

        if layer_id < cfg.n_dense_layers:
            I = cfg.inter_dim
            w1, w2, w3 = xavier(I, D), xavier(D, I), xavier(I, D)
            ffn = {"w13_t": jnp.concatenate([w1.T, w3.T], axis=1).astype(COMPUTE_DTYPE),  # (D, 2I)
                   "w2_t": w2.T.astype(COMPUTE_DTYPE)}                                    # (I, D)
        else:
            I = cfg.moe_inter_dim
            E = cfg.n_routed_experts
            # TODO(synk): shared expert is stacked with routed experts; if
            # n_shared_experts*moe_inter_dim != moe_inter_dim it needs its own MLP kernel.
            assert cfg.n_shared_experts * cfg.moe_inter_dim == I
            w13s, w2s = [], []
            for _ in range(E + 1):                                      # slot E = shared expert
                w1, w2, w3 = xavier(I, D), xavier(D, I), xavier(I, D)
                w13s.append(jnp.concatenate([w1.T, w3.T], axis=1).astype(COMPUTE_DTYPE))
                w2s.append(w2.T.astype(COMPUTE_DTYPE))
            ffn = {"gate_w_t": xavier(E, D).T,                          # (D, E) f32
                   "w13_stack": jnp.stack(w13s),                        # (E+1, D, 2I)
                   "w2_stack": jnp.stack(w2s)}                          # (E+1, I, D)
        layers.append({"attn": attn, "ffn": ffn,
                       "attn_norm_w": jnp.ones((1, D), jnp.float32),
                       "ffn_norm_w": jnp.ones((1, D), jnp.float32)})
    params["layers"] = layers
    params["norm_w"] = jnp.ones((1, D), jnp.float32)
    params["head_t"] = xavier(cfg.vocab_size, D).T.astype(COMPUTE_DTYPE)   # (D, V)
    cos, sin = precompute_freqs_cis(cfg)
    params["freqs_cos"] = cos
    params["freqs_sin"] = sin
    return params


if __name__ == "__main__":
    cfg = Cfg()
    key = jax.random.PRNGKey(0)
    pkey, tkey = jax.random.split(key)
    params = init_params(pkey, cfg)

    B, S = 2, 8
    tokens = jax.random.randint(tkey, (B, S), 0, cfg.vocab_size, dtype=jnp.int32)

    fwd = jax.jit(lambda p, t: transformer_forward(p, t, cfg, start_pos=0))
    logits = jax.block_until_ready(fwd(params, tokens))

    assert logits.shape == (B, cfg.vocab_size)
    assert bool(jnp.all(jnp.isfinite(logits)))
    print("KERNEL_OK")
</pallas_src>

<mosaic_0001>
module attributes {stable_mosaic.version = 11 : i64} {
  func.func @_attn_block_kernel(%arg0: i32, %arg1: memref<16x64xbf16, #tpu.memory_space<vmem>>, %arg2: memref<1x64xf32, #tpu.memory_space<vmem>>, %arg3: memref<64x128xbf16, #tpu.memory_space<vmem>>, %arg4: memref<16x128xf32, #tpu.memory_space<vmem>>, %arg5: memref<16x128xf32, #tpu.memory_space<vmem>>, %arg6: memref<16x128xf32, #tpu.memory_space<vmem>>, %arg7: memref<1x40xf32, #tpu.memory_space<vmem>>, %arg8: memref<48x80xbf16, #tpu.memory_space<vmem>>, %arg9: memref<64x64xbf16, #tpu.memory_space<vmem>>, %arg10: memref<1x64xf32, #tpu.memory_space<vmem>>, %arg11: memref<16x128xbf16, #tpu.memory_space<vmem>>) attributes {dimension_semantics = [#tpu.dimension_semantics<arbitrary>], iteration_bounds = array<i64: 1>, scalar_prefetch = 0 : i64, scratch_operands = 0 : i64, tpu.core_type = #tpu.core_type<tc>, window_params = [{pipeline_mode = #tpu.pipeline_mode<synchronous>, transform_indices = @transform_0, window_bounds = array<i64: 16, 64>}, {pipeline_mode = #tpu.pipeline_mode<synchronous>, transform_indices = @transform_1, window_bounds = array<i64: 1, 64>}, {pipeline_mode = #tpu.pipeline_mode<synchronous>, transform_indices = @transform_2, window_bounds = array<i64: 64, 128>}, {pipeline_mode = #tpu.pipeline_mode<synchronous>, transform_indices = @transform_3, window_bounds = array<i64: 16, 128>}, {pipeline_mode = #tpu.pipeline_mode<synchronous>, transform_indices = @transform_4, window_bounds = array<i64: 16, 128>}, {pipeline_mode = #tpu.pipeline_mode<synchronous>, transform_indices = @transform_5, window_bounds = array<i64: 16, 128>}, {pipeline_mode = #tpu.pipeline_mode<synchronous>, transform_indices = @transform_6, window_bounds = array<i64: 1, 40>}, {pipeline_mode = #tpu.pipeline_mode<synchronous>, transform_indices = @transform_7, window_bounds = array<i64: 48, 80>}, {pipeline_mode = #tpu.pipeline_mode<synchronous>, transform_indices = @transform_8, window_bounds = array<i64: 64, 64>}, {pipeline_mode = #tpu.pipeline_mode<synchronous>, transform_indices = @transform_9, window_bounds = array<i64: 1, 64>}, {pipeline_mode = #tpu.pipeline_mode<synchronous>, transform_indices = @transform_10, window_bounds = array<i64: 16, 128>}]} {
    %c0 = arith.constant 0 : index
    %c0_0 = arith.constant 0 : index
    %0 = vector.load %arg1[%c0, %c0_0] : memref<16x64xbf16, #tpu.memory_space<vmem>>, vector<16x64xbf16>
    %1 = arith.extf %0 : vector<16x64xbf16> to vector<16x64xf32>
    %2 = arith.mulf %1, %1 : vector<16x64xf32>
    %cst = arith.constant dense<0.000000e+00> : vector<16xf32>
    %3 = vector.multi_reduction <add>, %2, %cst [1] : vector<16x64xf32> to vector<16xf32>
    %4 = vector.shape_cast %3 : vector<16xf32> to vector<16x1xf32>
    %cst_1 = arith.constant 6.400000e+01 : f32
    %5 = vector.broadcast %cst_1 : f32 to vector<16x1xf32>
    %6 = arith.divf %4, %5 : vector<16x1xf32>
    %cst_2 = arith.constant 9.99999997E-7 : f32
    %7 = vector.broadcast %cst_2 : f32 to vector<16x1xf32>
    %8 = arith.addf %6, %7 : vector<16x1xf32>
    %9 = math.rsqrt %8 : vector<16x1xf32>
    %10 = vector.broadcast %9 : vector<16x1xf32> to vector<16x64xf32>
    %11 = arith.mulf %1, %10 : vector<16x64xf32>
    %c0_3 = arith.constant 0 : index
    %c0_4 = arith.constant 0 : index
    %12 = vector.load %arg2[%c0_3, %c0_4] : memref<1x64xf32, #tpu.memory_space<vmem>>, vector<1x64xf32>
    %13 = vector.broadcast %12 : vector<1x64xf32> to vector<16x64xf32>
    %14 = arith.mulf %11, %13 : vector<16x64xf32>
    %15 = arith.truncf %14 : vector<16x64xf32> to vector<16x64xbf16>
    %c0_5 = arith.constant 0 : index
    %c0_6 = arith.constant 0 : index
    %16 = vector.load %arg3[%c0_5, %c0_6] : memref<64x128xbf16, #tpu.memory_space<vmem>>, vector<64x128xbf16>
    %cst_7 = arith.constant dense<0.000000e+00> : vector<16x128xf32>
    %17 = tpu.matmul %15, %16, %cst_7 {dimension_numbers = #tpu.dot_dimension_numbers<[1], [0], [0], [1], [0, 0, 1, 1], [], []>} : vector<16x64xbf16>, vector<64x128xbf16>, vector<16x128xf32> -> vector<16x128xf32>
    %c0_8 = arith.constant 0 : index
    %c0_9 = arith.constant 0 : index
    %18 = vector.load %arg4[%c0_8, %c0_9] : memref<16x128xf32, #tpu.memory_space<vmem>>, vector<16x128xf32>
    %19 = arith.mulf %17, %18 : vector<16x128xf32>
    %c127_i32 = arith.constant 127 : i32
    %20 = tpu.dynamic_rotate %17 by %c127_i32 dim 1 : vector<16x128xf32>, i32 -> vector<16x128xf32>
    %c0_10 = arith.constant 0 : index
    %c0_11 = arith.constant 0 : index
    %21 = vector.load %arg5[%c0_10, %c0_11] : memref<16x128xf32, #tpu.memory_space<vmem>>, vector<16x128xf32>
    %22 = arith.mulf %20, %21 : vector<16x128xf32>
    %23 = arith.addf %19, %22 : vector<16x128xf32>
    %c1_i32 = arith.constant 1 : i32
    %24 = tpu.dynamic_rotate %17 by %c1_i32 dim 1 : vector<16x128xf32>, i32 -> vector<16x128xf32>
    %c0_12 = arith.constant 0 : index
    %c0_13 = arith.constant 0 : index
    %25 = vector.load %arg6[%c0_12, %c0_13] : memref<16x128xf32, #tpu.memory_space<vmem>>, vector<16x128xf32>
    %26 = arith.mulf %24, %25 : vector<16x128xf32>
    %27 = arith.addf %23, %26 : vector<16x128xf32>
    %28 = vector.extract_strided_slice %27 {offsets = [0, 0], sizes = [16, 48], strides = [1, 1]} : vector<16x128xf32> to vector<16x48xf32>
    %29 = arith.truncf %28 : vector<16x48xf32> to vector<16x48xbf16>
    %30 = vector.extract_strided_slice %27 {offsets = [0, 48], sizes = [16, 40], strides = [1, 1]} : vector<16x128xf32> to vector<16x40xf32>
    %31 = vector.extract_strided_slice %30 {offsets = [0, 0], sizes = [16, 32], strides = [1, 1]} : vector<16x40xf32> to vector<16x32xf32>
    %32 = vector.extract_strided_slice %30 {offsets = [0, 0], sizes = [16, 32], strides = [1, 1]} : vector<16x40xf32> to vector<16x32xf32>
    %33 = arith.mulf %31, %32 : vector<16x32xf32>
    %cst_14 = arith.constant dense<0.000000e+00> : vector<16xf32>
    %34 = vector.multi_reduction <add>, %33, %cst_14 [1] : vector<16x32xf32> to vector<16xf32>
    %35 = vector.shape_cast %34 : vector<16xf32> to vector<16x1xf32>
    %cst_15 = arith.constant 3.200000e+01 : f32
    %36 = vector.broadcast %cst_15 : f32 to vector<16x1xf32>
    %37 = arith.divf %35, %36 : vector<16x1xf32>
    %38 = tpu.iota {dimensions = array<i32: 1>} : vector<16x40xi32>
    %c32_i32 = arith.constant 32 : i32
    %39 = vector.broadcast %c32_i32 : i32 to vector<16x40xi32>
    %40 = arith.cmpi slt, %38, %39 : vector<16x40xi32>
    %cst_16 = arith.constant 9.99999997E-7 : f32
    %41 = vector.broadcast %cst_16 : f32 to vector<16x1xf32>
    %42 = arith.addf %37, %41 : vector<16x1xf32>
    %43 = math.rsqrt %42 : vector<16x1xf32>
    %cst_17 = arith.constant 1.000000e+00 : f32
    %44 = vector.shape_cast %43 : vector<16x1xf32> to vector<16x1xf32>
    %45 = vector.broadcast %44 : vector<16x1xf32> to vector<16x40xf32>
    %46 = vector.broadcast %cst_17 : f32 to vector<16x40xf32>
    %47 = arith.select %40, %45, %46 : vector<16x40xi1>, vector<16x40xf32>
    %c0_18 = arith.constant 0 : index
    %c0_19 = arith.constant 0 : index
    %48 = vector.load %arg7[%c0_18, %c0_19] : memref<1x40xf32, #tpu.memory_space<vmem>>, vector<1x40xf32>
    %49 = vector.broadcast %48 : vector<1x40xf32> to vector<16x40xf32>
    %50 = arith.mulf %47, %49 : vector<16x40xf32>
    %51 = arith.mulf %30, %50 : vector<16x40xf32>
    %52 = arith.truncf %51 : vector<16x40xf32> to vector<16x40xbf16>
    %c0_20 = arith.constant 0 : index
    %c0_21 = arith.constant 0 : index
    %53 = vector.load %arg8[%c0_20, %c0_21] : memref<48x80xbf16, #tpu.memory_space<vmem>>, vector<48x80xbf16>
    %cst_22 = arith.constant dense<0.000000e+00> : vector<16x80xf32>
    %54 = tpu.matmul %29, %53, %cst_22 {dimension_numbers = #tpu.dot_dimension_numbers<[1], [0], [0], [1], [0, 0, 1, 1], [], []>} : vector<16x48xbf16>, vector<48x80xbf16>, vector<16x80xf32> -> vector<16x80xf32>
    %55 = arith.truncf %54 : vector<16x80xf32> to vector<16x80xbf16>
    %56 = tpu.iota {dimensions = array<i32: 0>} : vector<16x16xi32>
    %57 = tpu.iota {dimensions = array<i32: 1>} : vector<16x16xi32>
    %c3_i32 = arith.constant 3 : i32
    %58 = vector.broadcast %c3_i32 : i32 to vector<16x16xi32>
    %59 = arith.shrui %56, %58 : vector<16x16xi32>
    %c3_i32_23 = arith.constant 3 : i32
    %60 = vector.broadcast %c3_i32_23 : i32 to vector<16x16xi32>
    %61 = arith.shrui %57, %60 : vector<16x16xi32>
    %62 = arith.cmpi sle, %57, %56 : vector<16x16xi32>
    %63 = arith.cmpi eq, %59, %61 : vector<16x16xi32>
    %64 = arith.andi %62, %63 : vector<16x16xi1>
    %cst_24 = arith.constant 0.000000e+00 : f32
    %cst_25 = arith.constant -1.000000e+30 : f32
    %65 = vector.broadcast %cst_24 : f32 to vector<16x16xf32>
    %66 = vector.broadcast %cst_25 : f32 to vector<16x16xf32>
    %67 = arith.select %64, %65, %66 : vector<16x16xi1>, vector<16x16xf32>
    %68 = vector.extract_strided_slice %52 {offsets = [0, 0], sizes = [16, 32], strides = [1, 1]} : vector<16x40xbf16> to vector<16x32xbf16>
    %c0_26 = arith.constant 0 : index
    %c0_27 = arith.constant 0 : index
    %69 = vector.load %arg9[%c0_26, %c0_27] : memref<64x64xbf16, #tpu.memory_space<vmem>>, vector<64x64xbf16>
    %cst_28 = arith.constant 0.000000e+00 : f32
    %70 = vector.broadcast %cst_28 : f32 to vector<16x64xf32>
    %71 = vector.extract_strided_slice %55 {offsets = [0, 0], sizes = [16, 40], strides = [1, 1]} : vector<16x80xbf16> to vector<16x40xbf16>
    %cst_29 = arith.constant dense<0.000000e+00> : vector<16x16xf32>
    %72 = tpu.matmul %71, %52, %cst_29 {dimension_numbers = #tpu.dot_dimension_numbers<[1], [1], [0], [0], [0, 0, 1, 0], [], []>} : vector<16x40xbf16>, vector<16x40xbf16>, vector<16x16xf32> -> vector<16x16xf32>
    %cst_30 = arith.constant 0.204124153 : f32
    %73 = vector.broadcast %cst_30 : f32 to vector<16x16xf32>
    %74 = arith.mulf %72, %73 : vector<16x16xf32>
    %75 = arith.addf %74, %67 : vector<16x16xf32>
    %cst_31 = arith.constant dense<0xFF800000> : vector<16xf32>
    %76 = vector.multi_reduction <maximumf>, %75, %cst_31 [1] : vector<16x16xf32> to vector<16xf32>
    %77 = vector.shape_cast %76 : vector<16xf32> to vector<16x1xf32>
    %78 = vector.broadcast %77 : vector<16x1xf32> to vector<16x16xf32>
    %79 = arith.subf %75, %78 : vector<16x16xf32>
    %80 = math.exp %79 : vector<16x16xf32>
    %cst_32 = arith.constant dense<0.000000e+00> : vector<16xf32>
    %81 = vector.multi_reduction <add>, %80, %cst_32 [1] : vector<16x16xf32> to vector<16xf32>
    %82 = vector.shape_cast %81 : vector<16xf32> to vector<16x1xf32>
    %83 = tpu.reciprocal %82 {approx = true} : vector<16x1xf32> -> vector<16x1xf32>
    %84 = vector.broadcast %83 : vector<16x1xf32> to vector<16x16xf32>
    %85 = arith.mulf %80, %84 : vector<16x16xf32>
    %86 = arith.truncf %85 : vector<16x16xf32> to vector<16x16xbf16>
    %cst_33 = arith.constant dense<0.000000e+00> : vector<16x32xf32>
    %87 = tpu.matmul %86, %68, %cst_33 {dimension_numbers = #tpu.dot_dimension_numbers<[1], [0], [0], [1], [0, 0, 1, 1], [], []>} : vector<16x16xbf16>, vector<16x32xbf16>, vector<16x32xf32> -> vector<16x32xf32>
    %88 = arith.truncf %87 : vector<16x32xf32> to vector<16x32xbf16>
    %89 = vector.extract_strided_slice %69 {offsets = [0, 0], sizes = [32, 64], strides = [1, 1]} : vector<64x64xbf16> to vector<32x64xbf16>
    %cst_34 = arith.constant dense<0.000000e+00> : vector<16x64xf32>
    %90 = tpu.matmul %88, %89, %cst_34 {dimension_numbers = #tpu.dot_dimension_numbers<[1], [0], [0], [1], [0, 0, 1, 1], [], []>} : vector<16x32xbf16>, vector<32x64xbf16>, vector<16x64xf32> -> vector<16x64xf32>
    %91 = arith.addf %70, %90 : vector<16x64xf32>
    %92 = vector.extract_strided_slice %55 {offsets = [0, 40], sizes = [16, 40], strides = [1, 1]} : vector<16x80xbf16> to vector<16x40xbf16>
    %cst_35 = arith.constant dense<0.000000e+00> : vector<16x16xf32>
    %93 = tpu.matmul %92, %52, %cst_35 {dimension_numbers = #tpu.dot_dimension_numbers<[1], [1], [0], [0], [0, 0, 1, 0], [], []>} : vector<16x40xbf16>, vector<16x40xbf16>, vector<16x16xf32> -> vector<16x16xf32>
    %cst_36 = arith.constant 0.204124153 : f32
    %94 = vector.broadcast %cst_36 : f32 to vector<16x16xf32>
    %95 = arith.mulf %93, %94 : vector<16x16xf32>
    %96 = arith.addf %95, %67 : vector<16x16xf32>
    %cst_37 = arith.constant dense<0xFF800000> : vector<16xf32>
    %97 = vector.multi_reduction <maximumf>, %96, %cst_37 [1] : vector<16x16xf32> to vector<16xf32>
    %98 = vector.shape_cast %97 : vector<16xf32> to vector<16x1xf32>
    %99 = vector.broadcast %98 : vector<16x1xf32> to vector<16x16xf32>
    %100 = arith.subf %96, %99 : vector<16x16xf32>
    %101 = math.exp %100 : vector<16x16xf32>
    %cst_38 = arith.constant dense<0.000000e+00> : vector<16xf32>
    %102 = vector.multi_reduction <add>, %101, %cst_38 [1] : vector<16x16xf32> to vector<16xf32>
    %103 = vector.shape_cast %102 : vector<16xf32> to vector<16x1xf32>
    %104 = tpu.reciprocal %103 {approx = true} : vector<16x1xf32> -> vector<16x1xf32>
    %105 = vector.broadcast %104 : vector<16x1xf32> to vector<16x16xf32>
    %106 = arith.mulf %101, %105 : vector<16x16xf32>
    %107 = arith.truncf %106 : vector<16x16xf32> to vector<16x16xbf16>
    %cst_39 = arith.constant dense<0.000000e+00> : vector<16x32xf32>
    %108 = tpu.matmul %107, %68, %cst_39 {dimension_numbers = #tpu.dot_dimension_numbers<[1], [0], [0], [1], [0, 0, 1, 1], [], []>} : vector<16x16xbf16>, vector<16x32xbf16>, vector<16x32xf32> -> vector<16x32xf32>
    %109 = arith.truncf %108 : vector<16x32xf32> to vector<16x32xbf16>
    %110 = vector.extract_strided_slice %69 {offsets = [32, 0], sizes = [32, 64], strides = [1, 1]} : vector<64x64xbf16> to vector<32x64xbf16>
    %cst_40 = arith.constant dense<0.000000e+00> : vector<16x64xf32>
    %111 = tpu.matmul %109, %110, %cst_40 {dimension_numbers = #tpu.dot_dimension_numbers<[1], [0], [0], [1], [0, 0, 1, 1], [], []>} : vector<16x32xbf16>, vector<32x64xbf16>, vector<16x64xf32> -> vector<16x64xf32>
    %112 = arith.addf %91, %111 : vector<16x64xf32>
    %113 = arith.addf %1, %112 : vector<16x64xf32>
    %114 = arith.mulf %113, %113 : vector<16x64xf32>
    %cst_41 = arith.constant dense<0.000000e+00> : vector<16xf32>
    %115 = vector.multi_reduction <add>, %114, %cst_41 [1] : vector<16x64xf32> to vector<16xf32>
    %116 = vector.shape_cast %115 : vector<16xf32> to vector<16x1xf32>
    %cst_42 = arith.constant 6.400000e+01 : f32
    %117 = vector.broadcast %cst_42 : f32 to vector<16x1xf32>
    %118 = arith.divf %116, %117 : vector<16x1xf32>
    %cst_43 = arith.constant 9.99999997E-7 : f32
    %119 = vector.broadcast %cst_43 : f32 to vector<16x1xf32>
    %120 = arith.addf %118, %119 : vector<16x1xf32>
    %121 = math.rsqrt %120 : vector<16x1xf32>
    %122 = vector.broadcast %121 : vector<16x1xf32> to vector<16x64xf32>
    %123 = arith.mulf %113, %122 : vector<16x64xf32>
    %c0_44 = arith.constant 0 : index
    %c0_45 = arith.constant 0 : index
    %124 = vector.load %arg10[%c0_44, %c0_45] : memref<1x64xf32, #tpu.memory_space<vmem>>, vector<1x64xf32>
    %125 = vector.broadcast %124 : vector<1x64xf32> to vector<16x64xf32>
    %126 = arith.mulf %123, %125 : vector<16x64xf32>
    %127 = arith.truncf %113 : vector<16x64xf32> to vector<16x64xbf16>
    %128 = arith.truncf %126 : vector<16x64xf32> to vector<16x64xbf16>
    %129 = tpu.concatenate %127, %128 in 1 : vector<16x64xbf16>, vector<16x64xbf16> -> vector<16x128xbf16>
    %c0_46 = arith.constant 0 : index
    %c0_47 = arith.constant 0 : index
    %130 = vector.load %arg11[%c0_46, %c0_47] : memref<16x128xbf16, #tpu.memory_space<vmem>>, vector<16x128xbf16>
    tpu.vector_store %arg11[%c0_46, %c0_47], %129 {strides = array<i32>} : memref<16x128xbf16, #tpu.memory_space<vmem>>, vector<16x128xbf16>,
    return
  }
  func.func @transform_0(%arg0: i32) -> (i32, i32) {
    %c0_i32 = arith.constant 0 : i32
    %c0_i32_0 = arith.constant 0 : i32
    %c0_i32_1 = arith.constant 0 : i32
    return %c0_i32, %c0_i32_0 : i32, i32
  }
  func.func @transform_1(%arg0: i32) -> (i32, i32) {
    %c0_i32 = arith.constant 0 : i32
    %c0_i32_0 = arith.constant 0 : i32
    %c0_i32_1 = arith.constant 0 : i32
    return %c0_i32, %c0_i32_0 : i32, i32
  }
  func.func @transform_2(%arg0: i32) -> (i32, i32) {
    %c0_i32 = arith.constant 0 : i32
    %c0_i32_0 = arith.constant 0 : i32
    %c0_i32_1 = arith.constant 0 : i32
    return %c0_i32, %c0_i32_0 : i32, i32
  }
  func.func @transform_3(%arg0: i32) -> (i32, i32) {
    %c0_i32 = arith.constant 0 : i32
    %c0_i32_0 = arith.constant 0 : i32
    %c0_i32_1 = arith.constant 0 : i32
    return %c0_i32, %c0_i32_0 : i32, i32
  }
  func.func @transform_4(%arg0: i32) -> (i32, i32) {
    %c0_i32 = arith.constant 0 : i32
    %c0_i32_0 = arith.constant 0 : i32
    %c0_i32_1 = arith.constant 0 : i32
    return %c0_i32, %c0_i32_0 : i32, i32
  }
  func.func @transform_5(%arg0: i32) -> (i32, i32) {
    %c0_i32 = arith.constant 0 : i32
    %c0_i32_0 = arith.constant 0 : i32
    %c0_i32_1 = arith.constant 0 : i32
    return %c0_i32, %c0_i32_0 : i32, i32
  }
  func.func @transform_6(%arg0: i32) -> (i32, i32) {
    %c0_i32 = arith.constant 0 : i32
    %c0_i32_0 = arith.constant 0 : i32
    %c0_i32_1 = arith.constant 0 : i32
    return %c0_i32, %c0_i32_0 : i32, i32
  }
  func.func @transform_7(%arg0: i32) -> (i32, i32) {
    %c0_i32 = arith.constant 0 : i32
    %c0_i32_0 = arith.constant 0 : i32
    %c0_i32_1 = arith.constant 0 : i32
    return %c0_i32, %c0_i32_0 : i32, i32
  }
  func.func @transform_8(%arg0: i32) -> (i32, i32) {
    %c0_i32 = arith.constant 0 : i32
    %c0_i32_0 = arith.constant 0 : i32
    %c0_i32_1 = arith.constant 0 : i32
    return %c0_i32, %c0_i32_0 : i32, i32
  }
  func.func @transform_9(%arg0: i32) -> (i32, i32) {
    %c0_i32 = arith.constant 0 : i32
    %c0_i32_0 = arith.constant 0 : i32
    %c0_i32_1 = arith.constant 0 : i32
    return %c0_i32, %c0_i32_0 : i32, i32
  }
  func.func @transform_10(%arg0: i32) -> (i32, i32) {
    %c0_i32 = arith.constant 0 : i32
    %c0_i32_0 = arith.constant 0 : i32
    %c0_i32_1 = arith.constant 0 : i32
    return %c0_i32, %c0_i32_0 : i32, i32
  }
}

module attributes {stable_mosaic.version = 11 : i64} {
  func.func @_dense_mlp_kernel(%arg0: i32, %arg1: memref<8x128xbf16, #tpu.memory_space<vmem>>, %arg2: memref<64x192xbf16, #tpu.memory_space<vmem>>, %arg3: memref<96x64xbf16, #tpu.memory_space<vmem>>, %arg4: memref<8x64xbf16, #tpu.memory_space<vmem>>) attributes {dimension_semantics = [#tpu.dimension_semantics<parallel>], iteration_bounds = array<i64: 2>, scalar_prefetch = 0 : i64, scratch_operands = 0 : i64, tpu.core_type = #tpu.core_type<tc>, window_params = [{transform_indices = @transform_0, window_bounds = array<i64: 8, 128>}, {pipeline_mode = #tpu.pipeline_mode<synchronous>, transform_indices = @transform_1, window_bounds = array<i64: 64, 192>}, {pipeline_mode = #tpu.pipeline_mode<synchronous>, transform_indices = @transform_2, window_bounds = array<i64: 96, 64>}, {transform_indices = @transform_3, window_bounds = array<i64: 8, 64>}]} {
    %c0 = arith.constant 0 : index
    %c0_0 = arith.constant 0 : index
    %0 = vector.load %arg1[%c0, %c0_0] : memref<8x128xbf16, #tpu.memory_space<vmem>>, vector<8x64xbf16>
    %1 = arith.extf %0 : vector<8x64xbf16> to vector<8x64xf32>
    %c0_1 = arith.constant 0 : index
    %c64 = arith.constant 64 : index
    %2 = vector.load %arg1[%c0_1, %c64] : memref<8x128xbf16, #tpu.memory_space<vmem>>, vector<8x64xbf16>
    %c0_2 = arith.constant 0 : index
    %c0_3 = arith.constant 0 : index
    %3 = vector.load %arg2[%c0_2, %c0_3] : memref<64x192xbf16, #tpu.memory_space<vmem>>, vector<64x192xbf16>
    %cst = arith.constant dense<0.000000e+00> : vector<8x192xf32>
    %4 = tpu.matmul %2, %3, %cst {dimension_numbers = #tpu.dot_dimension_numbers<[1], [0], [0], [1], [0, 0, 1, 1], [], []>} : vector<8x64xbf16>, vector<64x192xbf16>, vector<8x192xf32> -> vector<8x192xf32>
    %5 = vector.extract_strided_slice %4 {offsets = [0, 0], sizes = [8, 96], strides = [1, 1]} : vector<8x192xf32> to vector<8x96xf32>
    %6 = arith.negf %5 : vector<8x96xf32>
    %7 = math.exp %6 : vector<8x96xf32>
    %cst_4 = arith.constant 1.000000e+00 : f32
    %8 = vector.broadcast %cst_4 : f32 to vector<8x96xf32>
    %9 = arith.addf %8, %7 : vector<8x96xf32>
    %10 = arith.divf %8, %9 : vector<8x96xf32>
    %11 = arith.mulf %5, %10 : vector<8x96xf32>
    %12 = vector.extract_strided_slice %4 {offsets = [0, 96], sizes = [8, 96], strides = [1, 1]} : vector<8x192xf32> to vector<8x96xf32>
    %13 = arith.mulf %11, %12 : vector<8x96xf32>
    %14 = arith.truncf %13 : vector<8x96xf32> to vector<8x96xbf16>
    %c0_5 = arith.constant 0 : index
    %c0_6 = arith.constant 0 : index
    %15 = vector.load %arg3[%c0_5, %c0_6] : memref<96x64xbf16, #tpu.memory_space<vmem>>, vector<96x64xbf16>
    %cst_7 = arith.constant dense<0.000000e+00> : vector<8x64xf32>
    %16 = tpu.matmul %14, %15, %cst_7 {dimension_numbers = #tpu.dot_dimension_numbers<[1], [0], [0], [1], [0, 0, 1, 1], [], []>} : vector<8x96xbf16>, vector<96x64xbf16>, vector<8x64xf32> -> vector<8x64xf32>
    %17 = arith.addf %1, %16 : vector<8x64xf32>
    %18 = arith.truncf %17 : vector<8x64xf32> to vector<8x64xbf16>
    %c0_8 = arith.constant 0 : index
    %c0_9 = arith.constant 0 : index
    %19 = vector.load %arg4[%c0_8, %c0_9] : memref<8x64xbf16, #tpu.memory_space<vmem>>, vector<8x64xbf16>
    tpu.vector_store %arg4[%c0_8, %c0_9], %18 {strides = array<i32>} : memref<8x64xbf16, #tpu.memory_space<vmem>>, vector<8x64xbf16>,
    return
  }
  func.func @transform_0(%arg0: i32) -> (i32, i32) {
    %c0_i32 = arith.constant 0 : i32
    %c0_i32_0 = arith.constant 0 : i32
    return %arg0, %c0_i32 : i32, i32
  }
  func.func @transform_1(%arg0: i32) -> (i32, i32) {
    %c0_i32 = arith.constant 0 : i32
    %c0_i32_0 = arith.constant 0 : i32
    %c0_i32_1 = arith.constant 0 : i32
    return %c0_i32, %c0_i32_0 : i32, i32
  }
  func.func @transform_2(%arg0: i32) -> (i32, i32) {
    %c0_i32 = arith.constant 0 : i32
    %c0_i32_0 = arith.constant 0 : i32
    %c0_i32_1 = arith.constant 0 : i32
    return %c0_i32, %c0_i32_0 : i32, i32
  }
  func.func @transform_3(%arg0: i32) -> (i32, i32) {
    %c0_i32 = arith.constant 0 : i32
    %c0_i32_0 = arith.constant 0 : i32
    return %arg0, %c0_i32 : i32, i32
  }
}

module attributes {stable_mosaic.version = 11 : i64} {
  func.func @_moe_kernel(%arg0: i32, %arg1: i32, %arg2: memref<2x5xi32, #tpu.memory_space<smem>>, %arg3: memref<8x128xbf16, #tpu.memory_space<vmem>>, %arg4: memref<1x64x64xbf16, #tpu.memory_space<vmem>>, %arg5: memref<1x32x64xbf16, #tpu.memory_space<vmem>>, %arg6: memref<8x5xf32, #tpu.memory_space<vmem>>, %arg7: memref<8x64xbf16, #tpu.memory_space<vmem>>, %arg8: memref<8x64xf32, #tpu.memory_space<vmem>>) attributes {dimension_semantics = [#tpu.dimension_semantics<parallel>, #tpu.dimension_semantics<arbitrary>], iteration_bounds = array<i64: 2, 5>, scalar_prefetch = 1 : i64, scratch_operands = 1 : i64, tpu.core_type = #tpu.core_type<tc>, window_params = [{transform_indices = @transform_0, window_bounds = array<i64: 8, 128>}, {transform_indices = @transform_1, window_bounds = array<i64: 1, 64, 64>}, {transform_indices = @transform_2, window_bounds = array<i64: 1, 32, 64>}, {transform_indices = @transform_3, window_bounds = array<i64: 8, 5>}, {transform_indices = @transform_4, window_bounds = array<i64: 8, 64>}]} {
    %c0_i32 = arith.constant 0 : i32
    %0 = arith.cmpi eq, %arg1, %c0_i32 : i32
    %1 = arith.extui %0 : i1 to i32
    %c0_i32_0 = arith.constant 0 : i32
    %2 = arith.cmpi ne, %1, %c0_i32_0 : i32
    scf.if %2 {
      %c0 = arith.constant 0 : index
      %c0_4 = arith.constant 0 : index
      %12 = vector.load %arg3[%c0, %c0_4] : memref<8x128xbf16, #tpu.memory_space<vmem>>, vector<8x64xbf16>
      %13 = arith.extf %12 : vector<8x64xbf16> to vector<8x64xf32>
      %c0_5 = arith.constant 0 : index
      %c0_6 = arith.constant 0 : index
      %14 = vector.load %arg8[%c0_5, %c0_6] : memref<8x64xf32, #tpu.memory_space<vmem>>, vector<8x64xf32>
      tpu.vector_store %arg8[%c0_5, %c0_6], %13 {strides = array<i32>} : memref<8x64xf32, #tpu.memory_space<vmem>>, vector<8x64xf32>,
    } else {
    }
    %3 = arith.index_cast %arg0 : i32 to index
    %4 = arith.index_cast %arg1 : i32 to index
    %5 = memref.load %arg2[%3, %4] : memref<2x5xi32, #tpu.memory_space<smem>>
    %c0_i32_1 = arith.constant 0 : i32
    %6 = arith.cmpi sgt, %5, %c0_i32_1 : i32
    %7 = arith.extui %6 : i1 to i32
    %c0_i32_2 = arith.constant 0 : i32
    %8 = arith.cmpi ne, %7, %c0_i32_2 : i32
    scf.if %8 {
      %c0 = arith.constant 0 : index
      %c64 = arith.constant 64 : index
      %12 = vector.load %arg3[%c0, %c64] : memref<8x128xbf16, #tpu.memory_space<vmem>>, vector<8x64xbf16>
      %c0_4 = arith.constant 0 : index
      %c0_5 = arith.constant 0 : index
      %c0_6 = arith.constant 0 : index
      %13 = vector.load %arg4[%c0_4, %c0_5, %c0_6] : memref<1x64x64xbf16, #tpu.memory_space<vmem>>, vector<1x64x64xbf16>
      %14 = vector.shape_cast %13 : vector<1x64x64xbf16> to vector<64x64xbf16>
      %cst = arith.constant dense<0.000000e+00> : vector<8x64xf32>
      %15 = tpu.matmul %12, %14, %cst {dimension_numbers = #tpu.dot_dimension_numbers<[1], [0], [0], [1], [0, 0, 1, 1], [], []>} : vector<8x64xbf16>, vector<64x64xbf16>, vector<8x64xf32> -> vector<8x64xf32>
      %16 = vector.extract_strided_slice %15 {offsets = [0, 0], sizes = [8, 32], strides = [1, 1]} : vector<8x64xf32> to vector<8x32xf32>
      %17 = arith.negf %16 : vector<8x32xf32>
      %18 = math.exp %17 : vector<8x32xf32>
      %cst_7 = arith.constant 1.000000e+00 : f32
      %19 = vector.broadcast %cst_7 : f32 to vector<8x32xf32>
      %20 = arith.addf %19, %18 : vector<8x32xf32>
      %21 = arith.divf %19, %20 : vector<8x32xf32>
      %22 = arith.mulf %16, %21 : vector<8x32xf32>
      %23 = vector.extract_strided_slice %15 {offsets = [0, 32], sizes = [8, 32], strides = [1, 1]} : vector<8x64xf32> to vector<8x32xf32>
      %24 = arith.mulf %22, %23 : vector<8x32xf32>
      %25 = arith.truncf %24 : vector<8x32xf32> to vector<8x32xbf16>
      %c0_8 = arith.constant 0 : index
      %c0_9 = arith.constant 0 : index
      %c0_10 = arith.constant 0 : index
      %26 = vector.load %arg5[%c0_8, %c0_9, %c0_10] : memref<1x32x64xbf16, #tpu.memory_space<vmem>>, vector<1x32x64xbf16>
      %27 = vector.shape_cast %26 : vector<1x32x64xbf16> to vector<32x64xbf16>
      %cst_11 = arith.constant dense<0.000000e+00> : vector<8x64xf32>
      %28 = tpu.matmul %25, %27, %cst_11 {dimension_numbers = #tpu.dot_dimension_numbers<[1], [0], [0], [1], [0, 0, 1, 1], [], []>} : vector<8x32xbf16>, vector<32x64xbf16>, vector<8x64xf32> -> vector<8x64xf32>
      %29 = tpu.iota {dimensions = array<i32: 1>} : vector<8x5xi32>
      %30 = vector.broadcast %arg1 : i32 to vector<8x5xi32>
      %31 = arith.cmpi eq, %29, %30 : vector<8x5xi32>
      %c0_12 = arith.constant 0 : index
      %c0_13 = arith.constant 0 : index
      %32 = vector.load %arg6[%c0_12, %c0_13] : memref<8x5xf32, #tpu.memory_space<vmem>>, vector<8x5xf32>
      %cst_14 = arith.constant 0.000000e+00 : f32
      %33 = vector.broadcast %cst_14 : f32 to vector<8x5xf32>
      %34 = arith.select %31, %32, %33 : vector<8x5xi1>, vector<8x5xf32>
      %cst_15 = arith.constant dense<0.000000e+00> : vector<8xf32>
      %35 = vector.multi_reduction <add>, %34, %cst_15 [1] : vector<8x5xf32> to vector<8xf32>
      %36 = vector.shape_cast %35 : vector<8xf32> to vector<8x1xf32>
      %c0_16 = arith.constant 0 : index
      %c0_17 = arith.constant 0 : index
      %37 = vector.load %arg8[%c0_16, %c0_17] : memref<8x64xf32, #tpu.memory_space<vmem>>, vector<8x64xf32>
      %38 = vector.broadcast %36 : vector<8x1xf32> to vector<8x64xf32>
      %39 = arith.mulf %28, %38 : vector<8x64xf32>
      %40 = arith.addf %37, %39 : vector<8x64xf32>
      %c0_18 = arith.constant 0 : index
      %c0_19 = arith.constant 0 : index
      %41 = vector.load %arg8[%c0_18, %c0_19] : memref<8x64xf32, #tpu.memory_space<vmem>>, vector<8x64xf32>
      tpu.vector_store %arg8[%c0_18, %c0_19], %40 {strides = array<i32>} : memref<8x64xf32, #tpu.memory_space<vmem>>, vector<8x64xf32>,
    } else {
    }
    %c4_i32 = arith.constant 4 : i32
    %9 = arith.cmpi eq, %arg1, %c4_i32 : i32
    %10 = arith.extui %9 : i1 to i32
    %c0_i32_3 = arith.constant 0 : i32
    %11 = arith.cmpi ne, %10, %c0_i32_3 : i32
    scf.if %11 {
      %c0 = arith.constant 0 : index
      %c0_4 = arith.constant 0 : index
      %12 = vector.load %arg8[%c0, %c0_4] : memref<8x64xf32, #tpu.memory_space<vmem>>, vector<8x64xf32>
      %13 = arith.truncf %12 : vector<8x64xf32> to vector<8x64xbf16>
      %c0_5 = arith.constant 0 : index
      %c0_6 = arith.constant 0 : index
      %14 = vector.load %arg7[%c0_5, %c0_6] : memref<8x64xbf16, #tpu.memory_space<vmem>>, vector<8x64xbf16>
      tpu.vector_store %arg7[%c0_5, %c0_6], %13 {strides = array<i32>} : memref<8x64xbf16, #tpu.memory_space<vmem>>, vector<8x64xbf16>,
    } else {
    }
    return
  }
  func.func @transform_0(%arg0: i32, %arg1: i32, %arg2: memref<2x5xi32, #tpu.memory_space<smem>>) -> (i32, i32) {
    %c0_i32 = arith.constant 0 : i32
    %c0_i32_0 = arith.constant 0 : i32
    return %arg0, %c0_i32 : i32, i32
  }
  func.func @transform_1(%arg0: i32, %arg1: i32, %arg2: memref<2x5xi32, #tpu.memory_space<smem>>) -> (i32, i32, i32) {
    %c0_i32 = arith.constant 0 : i32
    %c0_i32_0 = arith.constant 0 : i32
    %c0_i32_1 = arith.constant 0 : i32
    return %arg1, %c0_i32, %c0_i32_0 : i32, i32, i32
  }
  func.func @transform_2(%arg0: i32, %arg1: i32, %arg2: memref<2x5xi32, #tpu.memory_space<smem>>) -> (i32, i32, i32) {
    %c0_i32 = arith.constant 0 : i32
    %c0_i32_0 = arith.constant 0 : i32
    %c0_i32_1 = arith.constant 0 : i32
    return %arg1, %c0_i32, %c0_i32_0 : i32, i32, i32
  }
  func.func @transform_3(%arg0: i32, %arg1: i32, %arg2: memref<2x5xi32, #tpu.memory_space<smem>>) -> (i32, i32) {
    %c0_i32 = arith.constant 0 : i32
    %c0_i32_0 = arith.constant 0 : i32
    return %arg0, %c0_i32 : i32, i32
  }
  func.func @transform_4(%arg0: i32, %arg1: i32, %arg2: memref<2x5xi32, #tpu.memory_space<smem>>) -> (i32, i32) {
    %c0_i32 = arith.constant 0 : i32
    %c0_i32_0 = arith.constant 0 : i32
    return %arg0, %c0_i32 : i32, i32
  }
}

module attributes {stable_mosaic.version = 11 : i64} {
  func.func @_final_kernel(%arg0: i32, %arg1: memref<2x64xbf16, #tpu.memory_space<vmem>>, %arg2: memref<1x64xf32, #tpu.memory_space<vmem>>, %arg3: memref<64x128xbf16, #tpu.memory_space<vmem>>, %arg4: memref<2x128xf32, #tpu.memory_space<vmem>>) attributes {dimension_semantics = [#tpu.dimension_semantics<parallel>], iteration_bounds = array<i64: 1>, scalar_prefetch = 0 : i64, scratch_operands = 0 : i64, tpu.core_type = #tpu.core_type<tc>, window_params = [{pipeline_mode = #tpu.pipeline_mode<synchronous>, transform_indices = @transform_0, window_bounds = array<i64: 2, 64>}, {pipeline_mode = #tpu.pipeline_mode<synchronous>, transform_indices = @transform_1, window_bounds = array<i64: 1, 64>}, {transform_indices = @transform_2, window_bounds = array<i64: 64, 128>}, {transform_indices = @transform_3, window_bounds = array<i64: 2, 128>}]} {
    %c0 = arith.constant 0 : index
    %c0_0 = arith.constant 0 : index
    %0 = vector.load %arg1[%c0, %c0_0] : memref<2x64xbf16, #tpu.memory_space<vmem>>, vector<2x64xbf16>
    %1 = arith.extf %0 : vector<2x64xbf16> to vector<2x64xf32>
    %2 = arith.mulf %1, %1 : vector<2x64xf32>
    %cst = arith.constant dense<0.000000e+00> : vector<2xf32>
    %3 = vector.multi_reduction <add>, %2, %cst [1] : vector<2x64xf32> to vector<2xf32>
    %4 = vector.shape_cast %3 : vector<2xf32> to vector<2x1xf32>
    %cst_1 = arith.constant 6.400000e+01 : f32
    %5 = vector.broadcast %cst_1 : f32 to vector<2x1xf32>
    %6 = arith.divf %4, %5 : vector<2x1xf32>
    %cst_2 = arith.constant 9.99999997E-7 : f32
    %7 = vector.broadcast %cst_2 : f32 to vector<2x1xf32>
    %8 = arith.addf %6, %7 : vector<2x1xf32>
    %9 = math.rsqrt %8 : vector<2x1xf32>
    %10 = vector.broadcast %9 : vector<2x1xf32> to vector<2x64xf32>
    %11 = arith.mulf %1, %10 : vector<2x64xf32>
    %c0_3 = arith.constant 0 : index
    %c0_4 = arith.constant 0 : index
    %12 = vector.load %arg2[%c0_3, %c0_4] : memref<1x64xf32, #tpu.memory_space<vmem>>, vector<1x64xf32>
    %13 = vector.broadcast %12 : vector<1x64xf32> to vector<2x64xf32>
    %14 = arith.mulf %11, %13 : vector<2x64xf32>
    %15 = arith.truncf %14 : vector<2x64xf32> to vector<2x64xbf16>
    %c0_5 = arith.constant 0 : index
    %c0_6 = arith.constant 0 : index
    %16 = vector.load %arg3[%c0_5, %c0_6] : memref<64x128xbf16, #tpu.memory_space<vmem>>, vector<64x128xbf16>
    %cst_7 = arith.constant dense<0.000000e+00> : vector<2x128xf32>
    %17 = tpu.matmul %15, %16, %cst_7 {dimension_numbers = #tpu.dot_dimension_numbers<[1], [0], [0], [1], [0, 0, 1, 1], [], []>} : vector<2x64xbf16>, vector<64x128xbf16>, vector<2x128xf32> -> vector<2x128xf32>
    %c0_8 = arith.constant 0 : index
    %c0_9 = arith.constant 0 : index
    %18 = vector.load %arg4[%c0_8, %c0_9] : memref<2x128xf32, #tpu.memory_space<vmem>>, vector<2x128xf32>
    tpu.vector_store %arg4[%c0_8, %c0_9], %17 {strides = array<i32>} : memref<2x128xf32, #tpu.memory_space<vmem>>, vector<2x128xf32>,
    return
  }
  func.func @transform_0(%arg0: i32) -> (i32, i32) {
    %c0_i32 = arith.constant 0 : i32
    %c0_i32_0 = arith.constant 0 : i32
    %c0_i32_1 = arith.constant 0 : i32
    return %c0_i32, %c0_i32_0 : i32, i32
  }
  func.func @transform_1(%arg0: i32) -> (i32, i32) {
    %c0_i32 = arith.constant 0 : i32
    %c0_i32_0 = arith.constant 0 : i32
    %c0_i32_1 = arith.constant 0 : i32
    return %c0_i32, %c0_i32_0 : i32, i32
  }
  func.func @transform_2(%arg0: i32) -> (i32, i32) {
    %c0_i32 = arith.constant 0 : i32
    %c0_i32_0 = arith.constant 0 : i32
    return %c0_i32, %arg0 : i32, i32
  }
  func.func @transform_3(%arg0: i32) -> (i32, i32) {
    %c0_i32 = arith.constant 0 : i32
    %c0_i32_0 = arith.constant 0 : i32
    return %c0_i32, %arg0 : i32, i32
  }
}

</mosaic_0001>

<llo_original>
// kernel: _lambda_.5
$region0: #{_lambda_.5}
  #allocation0 [shape = 'u32[]', space=smem, size = 0x4, offset = 0x4, fixed_abs, tag = 'smem constant byte address 0x4 - core index']
  #allocation1 [shape = 'u32[144,128]{1,0:T(1,128)}', space=vmem, size = 0x12000, scoped, tag = 'internal scratch']
  %s0 = inlined_call_operand.vmem [shape: bf16[16,64], index: 0, kind: input, shape index: {}]
  %s1 = inlined_call_operand.vmem [shape: f32[1,64], index: 1, kind: input, shape index: {}]
  %s2 = inlined_call_operand.vmem [shape: bf16[64,128], index: 2, kind: input, shape index: {}]
  %s3 = inlined_call_operand.vmem [shape: f32[16,128], index: 3, kind: input, shape index: {}]
  %s4 = inlined_call_operand.vmem [shape: f32[16,128], index: 4, kind: input, shape index: {}]
  %s5 = inlined_call_operand.vmem [shape: f32[16,128], index: 5, kind: input, shape index: {}]
  %s6 = inlined_call_operand.vmem [shape: f32[1,40], index: 6, kind: input, shape index: {}]
  %s7 = inlined_call_operand.vmem [shape: bf16[48,80], index: 7, kind: input, shape index: {}]
  %s8 = inlined_call_operand.vmem [shape: bf16[64,64], index: 8, kind: input, shape index: {}]
  %s9 = inlined_call_operand.vmem [shape: f32[1,64], index: 9, kind: input, shape index: {}]
  %s10 = inlined_call_operand.vmem [shape: bf16[16,128], index: 10, kind: output, shape index: {}]
  %s11 = sld [smem:[#allocation0]]
  $region50: #{_lambda_.5} parent=0
    _
  %s13 = ssub.s32 1, %s11
  %s14 = scalar_select 0, %s13, %s11
  // Predicated region
  $region2: #{_lambda_.5} parent=0 // pred_check
    _
  $region3: #{_lambda_.5} parent=0 // pred_check_branch
    %16 = sbr.rel (0) target = $region5
  $region4: #{_lambda_.5} parent=0 // pred_region
    _
  $region5: #{_lambda_.5} parent=0 // pred_fallthru
    _
  // Predicated region
  $region6: #{_lambda_.5} parent=0 // pred_check
    _
  $region7: #{_lambda_.5} parent=0 // pred_check_branch
    %18 = sbr.rel (0) target = $region9
  $region8: #{_lambda_.5} parent=0 // pred_region
    _
  $region9: #{_lambda_.5} parent=0 // pred_fallthru
    _
  // Predicated region
  $region10: #{_lambda_.5} parent=0 // pred_check
    _
  $region11: #{_lambda_.5} parent=0 // pred_check_branch
    %20 = sbr.rel (0) target = $region13
  $region12: #{_lambda_.5} parent=0 // pred_region
    _
  $region13: #{_lambda_.5} parent=0 // pred_fallthru
    _
  // Predicated region
  $region14: #{_lambda_.5} parent=0 // pred_check
    _
  $region15: #{_lambda_.5} parent=0 // pred_check_branch
    %22 = sbr.rel (0) target = $region17
  $region16: #{_lambda_.5} parent=0 // pred_region
    _
  $region17: #{_lambda_.5} parent=0 // pred_fallthru
    _
  // Predicated region
  $region18: #{_lambda_.5} parent=0 // pred_check
    _
  $region19: #{_lambda_.5} parent=0 // pred_check_branch
    %24 = sbr.rel (0) target = $region21
  $region20: #{_lambda_.5} parent=0 // pred_region
    _
  $region21: #{_lambda_.5} parent=0 // pred_fallthru
    _
  // Predicated region
  $region22: #{_lambda_.5} parent=0 // pred_check
    _
  $region23: #{_lambda_.5} parent=0 // pred_check_branch
    %26 = sbr.rel (0) target = $region25
  $region24: #{_lambda_.5} parent=0 // pred_region
    _
  $region25: #{_lambda_.5} parent=0 // pred_fallthru
    _
  // Predicated region
  $region26: #{_lambda_.5} parent=0 // pred_check
    _
  $region27: #{_lambda_.5} parent=0 // pred_check_branch
    %28 = sbr.rel (0) target = $region29
  $region28: #{_lambda_.5} parent=0 // pred_region
    _
  $region29: #{_lambda_.5} parent=0 // pred_fallthru
    _
  // Predicated region
  $region30: #{_lambda_.5} parent=0 // pred_check
    _
  $region31: #{_lambda_.5} parent=0 // pred_check_branch
    %30 = sbr.rel (0) target = $region33
  $region32: #{_lambda_.5} parent=0 // pred_region
    _
  $region33: #{_lambda_.5} parent=0 // pred_fallthru
    _
  // Predicated region
  $region34: #{_lambda_.5} parent=0 // pred_check
    _
  $region35: #{_lambda_.5} parent=0 // pred_check_branch
    %32 = sbr.rel (0) target = $region37
  $region36: #{_lambda_.5} parent=0 // pred_region
    _
  $region37: #{_lambda_.5} parent=0 // pred_fallthru
    _
  // Predicated region
  $region38: #{_lambda_.5} parent=0 // pred_check
    _
  $region39: #{_lambda_.5} parent=0 // pred_check_branch
    %34 = sbr.rel (0) target = $region41
  $region40: #{_lambda_.5} parent=0 // pred_region
    _
  $region41: #{_lambda_.5} parent=0 // pred_fallthru
    _
  %v36 = vld [vmem:[%s0] sm:$0xf]
  %v37 = vld [vmem:[%s0 + $0x4] sm:$0xf]
  %v38 = vunpack.c.l.bf16 %v36
  %v39 = vunpack.c.l.bf16 %v37
  %v40 = vmul.f32 %v38, %v38
  %v41 = vmul.f32 %v39, %v39
  %vm42 = vcmask 523264
  %v43 = vsel %vm42, %v40, 0.0
  %44 = vadd.xlane.f32.xlu0 %v43
  %v45 = vpop.xlane.xlu0 %44
  %v46 = vsel %vm42, %v41, 0.0
  %47 = vadd.xlane.f32.xlu0 %v46
  %v48 = vpop.xlane.xlu0 %47
  %v49 = vrcp.pop 64.0
  %v50 = vmul.f32 %v45, %v49
  %v51 = vmul.f32 %v48, %v49
  %v52 = vadd.f32 %v50, 1e-06
  %v53 = vadd.f32 %v51, 1e-06
  %v54 = vrsqrt.pop %v52
  %v55 = vrsqrt.pop %v53
  %v56 = vmul.f32 %v38, %v54
  %v57 = vmul.f32 %v39, %v55
  %v58 = vld [vmem:[%s1] sm:$0x1]
  %v60 = vlaneseq
  %v61 = vshrl.u32 %v60, 7
  %v62 = vsub.s32 0, %v61
  %v63 = vrot.slane %v58, %v62
  %v65 = vmul.f32 %v56, %v63
  %v66 = vmul.f32 %v57, %v63
  %v67 = vpack.c.bf16 %v66, %v65
  %v68 = vld [vmem:[%s2] sm:$0xf]
  %v69 = vld [vmem:[%s2 + $0x4] sm:$0xf]
  %v70 = vld [vmem:[%s2 + $0x8] sm:$0xf]
  %v71 = vld [vmem:[%s2 + $0xc] sm:$0xf]
  %v72 = vld [vmem:[%s2 + $0x10] sm:$0xf]
  %v73 = vld [vmem:[%s2 + $0x14] sm:$0xf]
  %v74 = vld [vmem:[%s2 + $0x18] sm:$0xf]
  %v75 = vld [vmem:[%s2 + $0x1c] sm:$0xf]
  %v84 = vunpack.c.l.b16 %v68
  %v85 = vunpack.c.l.b16 %v69
  %v86 = vunpack.c.l.b16 %v70
  %v87 = vunpack.c.l.b16 %v71
  %v88 = vunpack.c.l.b16 %v72
  %v89 = vunpack.c.l.b16 %v73
  %v90 = vunpack.c.l.b16 %v74
  %v91 = vunpack.c.l.b16 %v75
  %v92 = vpack.c.b16 %v85, %v84
  %v93 = vpack.c.b16 %v87, %v86
  %v94 = vpack.c.b16 %v89, %v88
  %v95 = vpack.c.b16 %v91, %v90
  %v101 = vsel %vm42, %v67, 0
  %103 = vmatprep.subr.bf16.mxu0 0
  %104 = vmatpush1.bf16.msra.mxu0 %v92
  %105 = vmatprep.subr.bf16.mxu0 0
  %106 = vmatpush1.bf16.msra.mxu0 %v93
  %107 = vmatprep.subr.bf16.mxu0 0
  %108 = vmatpush1.bf16.msra.mxu0 %v94
  %109 = vmatprep.subr.bf16.mxu0 0
  %110 = vmatpush1.bf16.msra.mxu0 %v95
  %111 = vmatprep.subr.bf16.mxu0 0
  %112 = vmatpush1.bf16.msra.mxu0 0
  %113 = vmatprep.subr.bf16.mxu0 0
  %114 = vmatpush1.bf16.msra.mxu0 0
  %115 = vmatprep.subr.bf16.mxu0 0
  %116 = vmatpush1.bf16.msra.mxu0 0
  %117 = vmatprep.subr.bf16.mxu0 0
  %118 = vmatpush1.bf16.msra.mxu0 0
  %119 = vmatprep.subr.bf16.mxu0 0
  %120 = vmatpush1.bf16.msra.mxu0 0
  %121 = vmatprep.subr.bf16.mxu0 0
  %122 = vmatpush1.bf16.msra.mxu0 0
  %123 = vmatprep.subr.bf16.mxu0 0
  %124 = vmatpush1.bf16.msra.mxu0 0
  %125 = vmatprep.subr.bf16.mxu0 0
  %126 = vmatpush1.bf16.msra.mxu0 0
  %127 = vmatprep.subr.bf16.mxu0 0
  %128 = vmatpush1.bf16.msra.mxu0 0
  %129 = vmatprep.subr.bf16.mxu0 0
  %130 = vmatpush1.bf16.msra.mxu0 0
  %131 = vmatprep.subr.bf16.mxu0 0
  %132 = vmatpush1.bf16.msra.mxu0 0
  %133 = vmatprep.subr.bf16.mxu0 0
  %134 = vmatpush1.bf16.msra.mxu0 0
  %135 = vmatprep.mubr.bf16.mxu0 0
  %136 = vmatmul.mubr.bf16.gmra.mrb[0].mxu0 %v101
  %v137 = vpop.f32.mrb[0].mxu0
  %v138 = vadd.f32 0.0, %v137
  %v139 = vpop.f32.mrb[0].mxu0
  %v140 = vpop.f32.mrb[0].mxu0
  %v141 = vadd.f32 0.0, %v140
  %v142 = vpop.f32.mrb[0].mxu0
  %143 = vdwg.mxu0
  %v144 = vld [vmem:[%s3] sm:$0xff]
  %v145 = vld [vmem:[%s3 + $0x8] sm:$0xff]
  %v146 = vmul.f32 %v138, %v144
  %v147 = vmul.f32 %v141, %v145
  %148 = vrot.lane.b32.xlu0 %v138, 127
  %v149 = vpop.permute.xlu0 %148
  %150 = vrot.lane.b32.xlu0 %v141, 127
  %v151 = vpop.permute.xlu0 %150
  %v152 = vld [vmem:[%s4] sm:$0xff]
  %v153 = vld [vmem:[%s4 + $0x8] sm:$0xff]
  %v154 = vmul.f32 %v149, %v152
  %v155 = vmul.f32 %v151, %v153
  %v156 = vadd.f32 %v146, %v154
  %v157 = vadd.f32 %v147, %v155
  %158 = vrot.lane.b32.xlu0 %v138, 1
  %v159 = vpop.permute.xlu0 %158
  %160 = vrot.lane.b32.xlu0 %v141, 1
  %v161 = vpop.permute.xlu0 %160
  %v162 = vld [vmem:[%s5] sm:$0xff]
  %v163 = vld [vmem:[%s5 + $0x8] sm:$0xff]
  %v164 = vmul.f32 %v159, %v162
  %v165 = vmul.f32 %v161, %v163
  %v166 = vadd.f32 %v156, %v164
  %v167 = vadd.f32 %v157, %v165
  %v168 = vpack.c.bf16 %v167, %v166
  %v169 = vmul.f32 %v166, %v166
  %v170 = vmul.f32 %v167, %v167
  %173 = vrot.lane.b32.xlu0 %v169, 80
  %v174 = vpop.permute.xlu0 %173
  %175 = vrot.lane.b32.xlu0 %v170, 80
  %v176 = vpop.permute.xlu0 %175
  %vm179 = vcmask 261120
  %v180 = vsel %vm179, %v174, 0.0
  %181 = vadd.xlane.f32.xlu0 %v180
  %v182 = vpop.xlane.xlu0 %181
  %v183 = vsel %vm179, %v176, 0.0
  %184 = vadd.xlane.f32.xlu0 %v183
  %v185 = vpop.xlane.xlu0 %184
  %v186 = vrcp.pop 32.0
  %v187 = vmul.f32 %v182, %v186
  %v188 = vmul.f32 %v185, %v186
  %v189 = vlaneseq
  %v190 = vand.u32 %v189, 127
  %vm191 = vcmp.lt.s32.totalorder %v190, 32
  %v192 = vadd.f32 %v187, 1e-06
  %v193 = vadd.f32 %v188, 1e-06
  %v194 = vrsqrt.pop %v192
  %v195 = vrsqrt.pop %v193
  %v196 = vsel %vm191, %v194, 1.0
  %v197 = vsel %vm191, %v195, 1.0
  %v198 = vld [vmem:[%s6] sm:$0x1]
  %v200 = vlaneseq
  %v201 = vshrl.u32 %v200, 7
  %v202 = vsub.s32 0, %v201
  %v203 = vrot.slane %v198, %v202
  %v205 = vmul.f32 %v196, %v203
  %v206 = vmul.f32 %v197, %v203
  %209 = vrot.lane.b32.xlu0 %v205, 48
  %v210 = vpop.permute.xlu0 %209
  %211 = vrot.lane.b32.xlu0 %v206, 48
  %v212 = vpop.permute.xlu0 %211
  %v215 = vmul.f32 %v166, %v210
  %v216 = vmul.f32 %v167, %v212
  %v217 = vpack.c.bf16 %v216, %v215
  %v218 = vld [vmem:[%s7] sm:$0xf]
  %v219 = vld [vmem:[%s7 + $0x4] sm:$0xf]
  %v220 = vld [vmem:[%s7 + $0x8] sm:$0xf]
  %v221 = vld [vmem:[%s7 + $0xc] sm:$0xf]
  %v222 = vld [vmem:[%s7 + $0x10] sm:$0xf]
  %v223 = vld [vmem:[%s7 + $0x14] sm:$0xf]
  %v230 = vunpack.c.l.b16 %v218
  %v231 = vunpack.c.l.b16 %v219
  %v232 = vunpack.c.l.b16 %v220
  %v233 = vunpack.c.l.b16 %v221
  %v234 = vunpack.c.l.b16 %v222
  %v235 = vunpack.c.l.b16 %v223
  %v236 = vpack.c.b16 %v231, %v230
  %v237 = vpack.c.b16 %v233, %v232
  %v238 = vpack.c.b16 %v235, %v234
  %vm242 = vcmask 392192
  %v244 = vsel %vm242, %v168, 0
  %246 = vmatprep.subr.bf16.mxu0 0
  %247 = vmatpush1.bf16.msra.mxu0 %v236
  %248 = vmatprep.subr.bf16.mxu0 0
  %249 = vmatpush1.bf16.msra.mxu0 %v237
  %250 = vmatprep.subr.bf16.mxu0 0
  %251 = vmatpush1.bf16.msra.mxu0 %v238
  %252 = vmatprep.subr.bf16.mxu0 0
  %253 = vmatpush1.bf16.msra.mxu0 0
  %254 = vmatprep.subr.bf16.mxu0 0
  %255 = vmatpush1.bf16.msra.mxu0 0
  %256 = vmatprep.subr.bf16.mxu0 0
  %257 = vmatpush1.bf16.msra.mxu0 0
  %258 = vmatprep.subr.bf16.mxu0 0
  %259 = vmatpush1.bf16.msra.mxu0 0
  %260 = vmatprep.subr.bf16.mxu0 0
  %261 = vmatpush1.bf16.msra.mxu0 0
  %262 = vmatprep.subr.bf16.mxu0 0
  %263 = vmatpush1.bf16.msra.mxu0 0
  %264 = vmatprep.subr.bf16.mxu0 0
  %265 = vmatpush1.bf16.msra.mxu0 0
  %266 = vmatprep.subr.bf16.mxu0 0
  %267 = vmatpush1.bf16.msra.mxu0 0
  %268 = vmatprep.subr.bf16.mxu0 0
  %269 = vmatpush1.bf16.msra.mxu0 0
  %270 = vmatprep.subr.bf16.mxu0 0
  %271 = vmatpush1.bf16.msra.mxu0 0
  %272 = vmatprep.subr.bf16.mxu0 0
  %273 = vmatpush1.bf16.msra.mxu0 0
  %274 = vmatprep.subr.bf16.mxu0 0
  %275 = vmatpush1.bf16.msra.mxu0 0
  %276 = vmatprep.subr.bf16.mxu0 0
  %277 = vmatpush1.bf16.msra.mxu0 0
  %278 = vmatprep.mubr.bf16.mxu0 0
  %279 = vmatmul.mubr.bf16.gmra.mrb[0].mxu0 %v244
  %v280 = vpop.f32.mrb[0].mxu0
  %v281 = vadd.f32 0.0, %v280
  %v282 = vpop.f32.mrb[0].mxu0
  %v283 = vpop.f32.mrb[0].mxu0
  %v284 = vadd.f32 0.0, %v283
  %v285 = vpop.f32.mrb[0].mxu0
  %286 = vdwg.mxu0
  %v287 = vpack.c.bf16 %v284, %v281
  %v288 = vlaneseq
  %v289 = vshrl.u32 %v288, 7
  %v290 = vadd.s32 %v289, 8
  %v291 = vshrl.u32 %v289, 3
  %v292 = vshrl.u32 %v290, 3
  %v293 = vshrl.u32 %v190, 3
  %vm294 = vcmp.le.s32.totalorder %v190, %v289
  %vm295 = vcmp.le.s32.totalorder %v190, %v290
  %vm296 = vcmp.eq.s32.totalorder %v291, %v293
  %vm297 = vcmp.eq.s32.totalorder %v292, %v293
  %vm298 = vmand %vm294, %vm296
  %vm299 = vmand %vm295, %vm297
  %v300 = vsel %vm298, 0.0, -1e+30
  %v301 = vsel %vm299, 0.0, -1e+30
  %v302 = vld [vmem:[%s8] sm:$0xf]
  %v303 = vld [vmem:[%s8 + $0x4] sm:$0xf]
  %v304 = vld [vmem:[%s8 + $0x8] sm:$0xf]
  %v305 = vld [vmem:[%s8 + $0xc] sm:$0xf]
  %v306 = vld [vmem:[%s8 + $0x10] sm:$0xf]
  %v307 = vld [vmem:[%s8 + $0x14] sm:$0xf]
  %v308 = vld [vmem:[%s8 + $0x18] sm:$0xf]
  %v309 = vld [vmem:[%s8 + $0x1c] sm:$0xf]
  %311 = vrot.lane.b32.xlu0 %v217, 80
  %v312 = vpop.permute.xlu0 %311
  %vm313 = vcmask 326656
  %v315 = vsel %vm313, %v287, 0
  %v318 = vsel %vm313, %v312, 0
  %320 = vmatprep.subr.bf16.mxu0 0
  %321 = vmatpush1.bf16.xpose.msra.mxu0 %v318
  %322 = vmatprep.subr.bf16.mxu0 0
  %323 = vmatpush1.bf16.xpose.msra.mxu0 0
  %324 = vmatprep.subr.bf16.mxu0 0
  %325 = vmatpush1.bf16.xpose.msra.mxu0 0
  %326 = vmatprep.subr.bf16.mxu0 0
  %327 = vmatpush1.bf16.xpose.msra.mxu0 0
  %328 = vmatprep.subr.bf16.mxu0 0
  %329 = vmatpush1.bf16.xpose.msra.mxu0 0
  %330 = vmatprep.subr.bf16.mxu0 0
  %331 = vmatpush1.bf16.xpose.msra.mxu0 0
  %332 = vmatprep.subr.bf16.mxu0 0
  %333 = vmatpush1.bf16.xpose.msra.mxu0 0
  %334 = vmatprep.subr.bf16.mxu0 0
  %335 = vmatpush1.bf16.xpose.msra.mxu0 0
  %336 = vmatprep.subr.bf16.mxu0 0
  %337 = vmatpush1.bf16.xpose.msra.mxu0 0
  %338 = vmatprep.subr.bf16.mxu0 0
  %339 = vmatpush1.bf16.xpose.msra.mxu0 0
  %340 = vmatprep.subr.bf16.mxu0 0
  %341 = vmatpush1.bf16.xpose.msra.mxu0 0
  %342 = vmatprep.subr.bf16.mxu0 0
  %343 = vmatpush1.bf16.xpose.msra.mxu0 0
  %344 = vmatprep.subr.bf16.mxu0 0
  %345 = vmatpush1.bf16.xpose.msra.mxu0 0
  %346 = vmatprep.subr.bf16.mxu0 0
  %347 = vmatpush1.bf16.xpose.msra.mxu0 0
  %348 = vmatprep.subr.bf16.mxu0 0
  %349 = vmatpush1.bf16.xpose.msra.mxu0 0
  %350 = vmatprep.subr.bf16.mxu0 0
  %351 = vmatpush1.bf16.xpose.msra.mxu0 0
  %352 = vmatprep.mubr.bf16.mxu0 0
  %353 = vmatmul.mubr.bf16.gmra.mrb[0].mxu0 %v315
  %v354 = vpop.f32.mrb[0].mxu0
  %v355 = vadd.f32 0.0, %v354
  %v356 = vpop.f32.mrb[0].mxu0
  %v357 = vpop.f32.mrb[0].mxu0
  %v358 = vadd.f32 0.0, %v357
  %v359 = vpop.f32.mrb[0].mxu0
  %360 = vdwg.mxu0
  %v361 = vmul.f32 %v355, 0.20412415
  %v362 = vmul.f32 %v358, 0.20412415
  %v363 = vadd.f32 %v361, %v300
  %v364 = vadd.f32 %v362, %v301
  %vm365 = vcmask 130048
  %v366 = vsel %vm365, %v363, -inf
  %367 = vmax.xlane.f32.xlu0 %v366
  %v368 = vpop.xlane.xlu0 %367
  %v369 = vsel %vm365, %v364, -inf
  %370 = vmax.xlane.f32.xlu0 %v369
  %v371 = vpop.xlane.xlu0 %370
  %v372 = vsub.f32 %v363, %v368
  %v373 = vsub.f32 %v364, %v371
  %v374 = vmul.f32 %v372, 1.442695
  %v375 = vpow.pop %v374
  %v376 = vmul.f32 %v373, 1.442695
  %v377 = vpow.pop %v376
  %v378 = vsel %vm365, %v375, 0.0
  %379 = vadd.xlane.f32.xlu0 %v378
  %v380 = vpop.xlane.xlu0 %379
  %v381 = vsel %vm365, %v377, 0.0
  %382 = vadd.xlane.f32.xlu0 %v381
  %v383 = vpop.xlane.xlu0 %382
  %v384 = vrcp.pop %v380
  %v385 = vrcp.pop %v383
  %v386 = vmul.f32 %v375, %v384
  %v387 = vmul.f32 %v377, %v385
  %v388 = vpack.c.bf16 %v387, %v386
  %v391 = vsel %vm365, %v388, 0
  %393 = vmatprep.subr.bf16.mxu0 0
  %394 = vmatpush1.bf16.msra.mxu0 %v312
  %395 = vmatprep.subr.bf16.mxu0 0
  %396 = vmatpush1.bf16.msra.mxu0 0
  %397 = vmatprep.subr.bf16.mxu0 0
  %398 = vmatpush1.bf16.msra.mxu0 0
  %399 = vmatprep.subr.bf16.mxu0 0
  %400 = vmatpush1.bf16.msra.mxu0 0
  %401 = vmatprep.subr.bf16.mxu0 0
  %402 = vmatpush1.bf16.msra.mxu0 0
  %403 = vmatprep.subr.bf16.mxu0 0
  %404 = vmatpush1.bf16.msra.mxu0 0
  %405 = vmatprep.subr.bf16.mxu0 0
  %406 = vmatpush1.bf16.msra.mxu0 0
  %407 = vmatprep.subr.bf16.mxu0 0
  %408 = vmatpush1.bf16.msra.mxu0 0
  %409 = vmatprep.subr.bf16.mxu0 0
  %410 = vmatpush1.bf16.msra.mxu0 0
  %411 = vmatprep.subr.bf16.mxu0 0
  %412 = vmatpush1.bf16.msra.mxu0 0
  %413 = vmatprep.subr.bf16.mxu0 0
  %414 = vmatpush1.bf16.msra.mxu0 0
  %415 = vmatprep.subr.bf16.mxu0 0
  %416 = vmatpush1.bf16.msra.mxu0 0
  %417 = vmatprep.subr.bf16.mxu0 0
  %418 = vmatpush1.bf16.msra.mxu0 0
  %419 = vmatprep.subr.bf16.mxu0 0
  %420 = vmatpush1.bf16.msra.mxu0 0
  %421 = vmatprep.subr.bf16.mxu0 0
  %422 = vmatpush1.bf16.msra.mxu0 0
  %423 = vmatprep.subr.bf16.mxu0 0
  %424 = vmatpush1.bf16.msra.mxu0 0
  %425 = vmatprep.mubr.bf16.mxu0 0
  %426 = vmatmul.mubr.bf16.gmra.mrb[0].mxu0 %v391
  %v427 = vpop.f32.mrb[0].mxu0
  %v428 = vadd.f32 0.0, %v427
  %v429 = vpop.f32.mrb[0].mxu0
  %v430 = vpop.f32.mrb[0].mxu0
  %v431 = vadd.f32 0.0, %v430
  %v432 = vpop.f32.mrb[0].mxu0
  %433 = vdwg.mxu0
  %v434 = vpack.c.bf16 %v431, %v428
  %436 = vrot.lane.b32.xlu0 %v287, 88
  %v437 = vpop.permute.xlu0 %436
  %v439 = vsel %vm313, %v437, 0
  %441 = vmatprep.subr.bf16.mxu0 0
  %442 = vmatpush1.bf16.xpose.msra.mxu0 %v318
  %443 = vmatprep.subr.bf16.mxu0 0
  %444 = vmatpush1.bf16.xpose.msra.mxu0 0
  %445 = vmatprep.subr.bf16.mxu0 0
  %446 = vmatpush1.bf16.xpose.msra.mxu0 0
  %447 = vmatprep.subr.bf16.mxu0 0
  %448 = vmatpush1.bf16.xpose.msra.mxu0 0
  %449 = vmatprep.subr.bf16.mxu0 0
  %450 = vmatpush1.bf16.xpose.msra.mxu0 0
  %451 = vmatprep.subr.bf16.mxu0 0
  %452 = vmatpush1.bf16.xpose.msra.mxu0 0
  %453 = vmatprep.subr.bf16.mxu0 0
  %454 = vmatpush1.bf16.xpose.msra.mxu0 0
  %455 = vmatprep.subr.bf16.mxu0 0
  %456 = vmatpush1.bf16.xpose.msra.mxu0 0
  %457 = vmatprep.subr.bf16.mxu0 0
  %458 = vmatpush1.bf16.xpose.msra.mxu0 0
  %459 = vmatprep.subr.bf16.mxu0 0
  %460 = vmatpush1.bf16.xpose.msra.mxu0 0
  %461 = vmatprep.subr.bf16.mxu0 0
  %462 = vmatpush1.bf16.xpose.msra.mxu0 0
  %463 = vmatprep.subr.bf16.mxu0 0
  %464 = vmatpush1.bf16.xpose.msra.mxu0 0
  %465 = vmatprep.subr.bf16.mxu0 0
  %466 = vmatpush1.bf16.xpose.msra.mxu0 0
  %467 = vmatprep.subr.bf16.mxu0 0
  %468 = vmatpush1.bf16.xpose.msra.mxu0 0
  %469 = vmatprep.subr.bf16.mxu0 0
  %470 = vmatpush1.bf16.xpose.msra.mxu0 0
  %471 = vmatprep.subr.bf16.mxu0 0
  %472 = vmatpush1.bf16.xpose.msra.mxu0 0
  %473 = vmatprep.mubr.bf16.mxu0 0
  %474 = vmatmul.mubr.bf16.gmra.mrb[0].mxu0 %v439
  %v475 = vpop.f32.mrb[0].mxu0
  %v476 = vadd.f32 0.0, %v475
  %v477 = vpop.f32.mrb[0].mxu0
  %v478 = vpop.f32.mrb[0].mxu0
  %v479 = vadd.f32 0.0, %v478
  %v480 = vpop.f32.mrb[0].mxu0
  %481 = vdwg.mxu0
  %v482 = vmul.f32 %v476, 0.20412415
  %v483 = vmul.f32 %v479, 0.20412415
  %v484 = vadd.f32 %v482, %v300
  %v485 = vadd.f32 %v483, %v301
  %v486 = vsel %vm365, %v484, -inf
  %487 = vmax.xlane.f32.xlu0 %v486
  %v488 = vpop.xlane.xlu0 %487
  %v489 = vsel %vm365, %v485, -inf
  %490 = vmax.xlane.f32.xlu0 %v489
  %v491 = vpop.xlane.xlu0 %490
  %v492 = vsub.f32 %v484, %v488
  %v493 = vsub.f32 %v485, %v491
  %v494 = vmul.f32 %v492, 1.442695
  %v495 = vpow.pop %v494
  %v496 = vmul.f32 %v493, 1.442695
  %v497 = vpow.pop %v496
  %v498 = vsel %vm365, %v495, 0.0
  %499 = vadd.xlane.f32.xlu0 %v498
  %v500 = vpop.xlane.xlu0 %499
  %v501 = vsel %vm365, %v497, 0.0
  %502 = vadd.xlane.f32.xlu0 %v501
  %v503 = vpop.xlane.xlu0 %502
  %v504 = vrcp.pop %v500
  %v505 = vrcp.pop %v503
  %v506 = vmul.f32 %v495, %v504
  %v507 = vmul.f32 %v497, %v505
  %v508 = vpack.c.bf16 %v507, %v506
  %v510 = vsel %vm365, %v508, 0
  %512 = vmatprep.subr.bf16.mxu0 0
  %513 = vmatpush1.bf16.msra.mxu0 %v312
  %514 = vmatprep.subr.bf16.mxu0 0
  %515 = vmatpush1.bf16.msra.mxu0 0
  %516 = vmatprep.subr.bf16.mxu0 0
  %517 = vmatpush1.bf16.msra.mxu0 0
  %518 = vmatprep.subr.bf16.mxu0 0
  %519 = vmatpush1.bf16.msra.mxu0 0
  %520 = vmatprep.subr.bf16.mxu0 0
  %521 = vmatpush1.bf16.msra.mxu0 0
  %522 = vmatprep.subr.bf16.mxu0 0
  %523 = vmatpush1.bf16.msra.mxu0 0
  %524 = vmatprep.subr.bf16.mxu0 0
  %525 = vmatpush1.bf16.msra.mxu0 0
  %526 = vmatprep.subr.bf16.mxu0 0
  %527 = vmatpush1.bf16.msra.mxu0 0
  %528 = vmatprep.subr.bf16.mxu0 0
  %529 = vmatpush1.bf16.msra.mxu0 0
  %530 = vmatprep.subr.bf16.mxu0 0
  %531 = vmatpush1.bf16.msra.mxu0 0
  %532 = vmatprep.subr.bf16.mxu0 0
  %533 = vmatpush1.bf16.msra.mxu0 0
  %534 = vmatprep.subr.bf16.mxu0 0
  %535 = vmatpush1.bf16.msra.mxu0 0
  %536 = vmatprep.subr.bf16.mxu0 0
  %537 = vmatpush1.bf16.msra.mxu0 0
  %538 = vmatprep.subr.bf16.mxu0 0
  %539 = vmatpush1.bf16.msra.mxu0 0
  %540 = vmatprep.subr.bf16.mxu0 0
  %541 = vmatpush1.bf16.msra.mxu0 0
  %542 = vmatprep.subr.bf16.mxu0 0
  %543 = vmatpush1.bf16.msra.mxu0 0
  %544 = vmatprep.mubr.bf16.mxu0 0
  %545 = vmatmul.mubr.bf16.gmra.mrb[0].mxu0 %v510
  %v546 = vpop.f32.mrb[0].mxu0
  %v547 = vadd.f32 0.0, %v546
  %v548 = vpop.f32.mrb[0].mxu0
  %v549 = vpop.f32.mrb[0].mxu0
  %v550 = vadd.f32 0.0, %v549
  %v551 = vpop.f32.mrb[0].mxu0
  %552 = vdwg.mxu0
  %v553 = vpack.c.bf16 %v550, %v547
  %v558 = vunpack.c.l.b16 %v306
  %v559 = vunpack.c.l.b16 %v307
  %v560 = vunpack.c.l.b16 %v308
  %v561 = vunpack.c.l.b16 %v309
  %v562 = vpack.c.b16 %v559, %v558
  %v563 = vpack.c.b16 %v561, %v560
  %v567 = vsel %vm179, %v553, 0
  %569 = vmatprep.subr.bf16.mxu0 0
  %570 = vmatpush1.bf16.msra.mxu0 %v562
  %571 = vmatprep.subr.bf16.mxu0 0
  %572 = vmatpush1.bf16.msra.mxu0 %v563
  %573 = vmatprep.subr.bf16.mxu0 0
  %574 = vmatpush1.bf16.msra.mxu0 0
  %575 = vmatprep.subr.bf16.mxu0 0
  %576 = vmatpush1.bf16.msra.mxu0 0
  %577 = vmatprep.subr.bf16.mxu0 0
  %578 = vmatpush1.bf16.msra.mxu0 0
  %579 = vmatprep.subr.bf16.mxu0 0
  %580 = vmatpush1.bf16.msra.mxu0 0
  %581 = vmatprep.subr.bf16.mxu0 0
  %582 = vmatpush1.bf16.msra.mxu0 0
  %583 = vmatprep.subr.bf16.mxu0 0
  %584 = vmatpush1.bf16.msra.mxu0 0
  %585 = vmatprep.subr.bf16.mxu0 0
  %586 = vmatpush1.bf16.msra.mxu0 0
  %587 = vmatprep.subr.bf16.mxu0 0
  %588 = vmatpush1.bf16.msra.mxu0 0
  %589 = vmatprep.subr.bf16.mxu0 0
  %590 = vmatpush1.bf16.msra.mxu0 0
  %591 = vmatprep.subr.bf16.mxu0 0
  %592 = vmatpush1.bf16.msra.mxu0 0
  %593 = vmatprep.subr.bf16.mxu0 0
  %594 = vmatpush1.bf16.msra.mxu0 0
  %595 = vmatprep.subr.bf16.mxu0 0
  %596 = vmatpush1.bf16.msra.mxu0 0
  %597 = vmatprep.subr.bf16.mxu0 0
  %598 = vmatpush1.bf16.msra.mxu0 0
  %599 = vmatprep.subr.bf16.mxu0 0
  %600 = vmatpush1.bf16.msra.mxu0 0
  %601 = vmatprep.mubr.bf16.mxu0 0
  %602 = vmatmul.mubr.bf16.gmra.mrb[0].mxu0 %v567
  %v603 = vpop.f32.mrb[0].mxu0
  %v604 = vadd.f32 0.0, %v603
  %v605 = vpop.f32.mrb[0].mxu0
  %v606 = vpop.f32.mrb[0].mxu0
  %v607 = vadd.f32 0.0, %v606
  %v608 = vpop.f32.mrb[0].mxu0
  %609 = vdwg.mxu0
  %v614 = vunpack.c.l.b16 %v302
  %v615 = vunpack.c.l.b16 %v303
  %v616 = vunpack.c.l.b16 %v304
  %v617 = vunpack.c.l.b16 %v305
  %v618 = vpack.c.b16 %v615, %v614
  %v619 = vpack.c.b16 %v617, %v616
  %v623 = vsel %vm179, %v434, 0
  %625 = vmatprep.subr.bf16.mxu0 0
  %626 = vmatpush1.bf16.msra.mxu0 %v618
  %627 = vmatprep.subr.bf16.mxu0 0
  %628 = vmatpush1.bf16.msra.mxu0 %v619
  %629 = vmatprep.subr.bf16.mxu0 0
  %630 = vmatpush1.bf16.msra.mxu0 0
  %631 = vmatprep.subr.bf16.mxu0 0
  %632 = vmatpush1.bf16.msra.mxu0 0
  %633 = vmatprep.subr.bf16.mxu0 0
  %634 = vmatpush1.bf16.msra.mxu0 0
  %635 = vmatprep.subr.bf16.mxu0 0
  %636 = vmatpush1.bf16.msra.mxu0 0
  %637 = vmatprep.subr.bf16.mxu0 0
  %638 = vmatpush1.bf16.msra.mxu0 0
  %639 = vmatprep.subr.bf16.mxu0 0
  %640 = vmatpush1.bf16.msra.mxu0 0
  %641 = vmatprep.subr.bf16.mxu0 0
  %642 = vmatpush1.bf16.msra.mxu0 0
  %643 = vmatprep.subr.bf16.mxu0 0
  %644 = vmatpush1.bf16.msra.mxu0 0
  %645 = vmatprep.subr.bf16.mxu0 0
  %646 = vmatpush1.bf16.msra.mxu0 0
  %647 = vmatprep.subr.bf16.mxu0 0
  %648 = vmatpush1.bf16.msra.mxu0 0
  %649 = vmatprep.subr.bf16.mxu0 0
  %650 = vmatpush1.bf16.msra.mxu0 0
  %651 = vmatprep.subr.bf16.mxu0 0
  %652 = vmatpush1.bf16.msra.mxu0 0
  %653 = vmatprep.subr.bf16.mxu0 0
  %654 = vmatpush1.bf16.msra.mxu0 0
  %655 = vmatprep.subr.bf16.mxu0 0
  %656 = vmatpush1.bf16.msra.mxu0 0
  %657 = vmatprep.mubr.bf16.mxu0 0
  %658 = vmatmul.mubr.bf16.gmra.mrb[0].mxu0 %v623
  %v659 = vpop.f32.mrb[0].mxu0
  %v660 = vadd.f32 %v604, %v659
  %v661 = vpop.f32.mrb[0].mxu0
  %v662 = vpop.f32.mrb[0].mxu0
  %v663 = vadd.f32 %v607, %v662
  %v664 = vpop.f32.mrb[0].mxu0
  %665 = vdwg.mxu0
  %v666 = vadd.f32 %v38, %v660
  %v667 = vadd.f32 %v39, %v663
  %v668 = vmul.f32 %v666, %v666
  %v669 = vmul.f32 %v667, %v667
  %v670 = vsel %vm42, %v668, 0.0
  %671 = vadd.xlane.f32.xlu0 %v670
  %v672 = vpop.xlane.xlu0 %671
  %v673 = vsel %vm42, %v669, 0.0
  %674 = vadd.xlane.f32.xlu0 %v673
  %v675 = vpop.xlane.xlu0 %674
  %v676 = vmul.f32 %v672, %v49
  %v677 = vmul.f32 %v675, %v49
  %v678 = vadd.f32 %v676, 1e-06
  %v679 = vadd.f32 %v677, 1e-06
  %v680 = vrsqrt.pop %v678
  %v681 = vrsqrt.pop %v679
  %v682 = vmul.f32 %v666, %v680
  %v683 = vmul.f32 %v667, %v681
  %v684 = vld [vmem:[%s9] sm:$0x1]
  %v686 = vlaneseq
  %v687 = vshrl.u32 %v686, 7
  %v688 = vsub.s32 0, %v687
  %v689 = vrot.slane %v684, %v688
  %v691 = vmul.f32 %v682, %v689
  %v692 = vmul.f32 %v683, %v689
  %v693 = vpack.c.bf16 %v667, %v666
  %v694 = vpack.c.bf16 %v692, %v691
  %696 = vrot.lane.b32.xlu0 %v694, 64
  %v697 = vpop.permute.xlu0 %696
  %v700 = vsel %vm42, %v693, %v697
  %v702 = vunpack.c.l.b16 %v700
  %v703 = vunpack.c.h.b16 %v700
  %v704 = vpack.c.b16 %v702, %v702
  %v705 = vpack.c.b16 %v703, %v703
  %708 = vst [vmem:[%s10] sm:$0xf] %v704
  %709 = vst [vmem:[%s10 + $0x4] sm:$0xf] %v705
  // Predicated region
  $region42: #{_lambda_.5} parent=0 // pred_check
    _
  $region43: #{_lambda_.5} parent=0 // pred_check_branch
    %711 = sbr.rel (0) target = $region45
  $region44: #{_lambda_.5} parent=0 // pred_region
    _
  $region45: #{_lambda_.5} parent=0 // pred_fallthru
    _
  // Predicated region
  $region46: #{_lambda_.5} parent=0 // pred_check
    _
  $region47: #{_lambda_.5} parent=0 // pred_check_branch
    %713 = sbr.rel (0) target = $region49
  $region48: #{_lambda_.5} parent=0 // pred_region
    _
  $region49: #{_lambda_.5} parent=0 // pred_fallthru
    _

// kernel: _lambda_.6
$region0: #{_lambda_.6}
  #allocation0 [shape = 'u32[]', space=smem, size = 0x4, offset = 0x4, fixed_abs, tag = 'smem constant byte address 0x4 - core index']
  #allocation1 [shape = 'u32[144,128]{1,0:T(1,128)}', space=vmem, size = 0x12000, scoped, tag = 'internal scratch']
  %s0 = inlined_call_operand.vmem [shape: bf16[16,128], index: 0, kind: input, shape index: {}]
  %s1 = inlined_call_operand.vmem [shape: bf16[64,192], index: 1, kind: input, shape index: {}]
  %s2 = inlined_call_operand.vmem [shape: bf16[96,64], index: 2, kind: input, shape index: {}]
  %s3 = inlined_call_operand.vmem [shape: bf16[16,64], index: 3, kind: output, shape index: {}]
  %s4 = sld [smem:[#allocation0]]
  $region45: #{_lambda_.6} parent=0
    _
  %s6 = ssub.s32 1, %s4
  %s7 = scalar_select 0, %s6, %s4
  loop: start=0, step=1, limit=4
  $region2: #{_lambda_.6} parent=0 // loop_pre_header
    _
  $region3: #{_lambda_.6} parent=0 // loop_header
    %s9 = sphi 0, %s13
    %p10 = scmp.ge.s32.totalorder %s9, 4
    %s19 = sphi 0, %s21
    %s22 = sphi 0, %s19
    %s23 = sphi 0, %s22
    %s39 = sphi 0, %s23
    %s43 = sphi 0, %s43
    %s45 = sphi 0, %s43
    %s46 = sphi 0, %s45
    %s60 = sphi 0, %s46
    %s64 = sphi 0, %s64
    %s66 = sphi 0, %s64
    %s67 = sphi 0, %s66
    %s81 = sphi 0, %s67
    %s87 = sphi 0, %s89
    %s90 = sphi 0, %s87
    %s91 = sphi 0, %s90
    %s107 = sphi 0, %s91
  $region4: #{_lambda_.6} parent=0 // loop_header_branch
    %12 = sbr.rel (%p10) target = $region8
  $region5: #{_lambda_.6} parent=0 // loop_body
    %s14 = ssub.s32 %s9, 1
    %s15 = ssub.s32 %s9, 2
    %s16 = sadd.s32 %s9, 1
    %s17 = ssub.s32 %s9, %s16
    %p18 = scmp.eq.s32.totalorder %s17, 0
    %s20 = sadd.s32 %s19, 1
    %s21 = scalar_select %p18, %s19, %s20
    %p24 = pneg %p18
    %p25 = scmp.eq.s32.totalorder %s9, 1
    %p26 = por %p24, %p25
    %p27 = scmp.ne.s32.totalorder %s19, %s22
    %p28 = scmp.eq.s32.totalorder %s9, 0
    %p29 = por %p27, %p28
    %p30 = scmp.ne.s32.totalorder %s19, %s22
    %p31 = scmp.eq.s32.totalorder %s14, 1
    %p32 = por %p30, %p31
    %p33 = scmp.ne.s32.totalorder %s22, %s23
    %p34 = scmp.eq.s32.totalorder %s14, 0
    %p35 = por %p33, %p34
    %p36 = scmp.ne.s32.totalorder %s22, %s23
    %p37 = scmp.eq.s32.totalorder %s15, 1
    %p38 = por %p36, %p37
    %p40 = scmp.ne.s32.totalorder %s23, %s39
    %p41 = scmp.eq.s32.totalorder %s15, 0
    %p42 = por %p40, %p41
    %s44 = sadd.s32 %s43, 1
    %p47 = scmp.eq.s32.totalorder %s9, 1
    %p48 = scmp.ne.s32.totalorder %s43, %s45
    %p49 = scmp.eq.s32.totalorder %s9, 0
    %p50 = por %p48, %p49
    %p51 = scmp.ne.s32.totalorder %s43, %s45
    %p52 = scmp.eq.s32.totalorder %s14, 1
    %p53 = por %p51, %p52
    %p54 = scmp.ne.s32.totalorder %s45, %s46
    %p55 = scmp.eq.s32.totalorder %s14, 0
    %p56 = por %p54, %p55
    %p57 = scmp.ne.s32.totalorder %s45, %s46
    %p58 = scmp.eq.s32.totalorder %s15, 1
    %p59 = por %p57, %p58
    %p61 = scmp.ne.s32.totalorder %s46, %s60
    %p62 = scmp.eq.s32.totalorder %s15, 0
    %p63 = por %p61, %p62
    %s65 = sadd.s32 %s64, 1
    %p68 = scmp.eq.s32.totalorder %s9, 1
    %p69 = scmp.ne.s32.totalorder %s64, %s66
    %p70 = scmp.eq.s32.totalorder %s9, 0
    %p71 = por %p69, %p70
    %p72 = scmp.ne.s32.totalorder %s64, %s66
    %p73 = scmp.eq.s32.totalorder %s14, 1
    %p74 = por %p72, %p73
    %p75 = scmp.ne.s32.totalorder %s66, %s67
    %p76 = scmp.eq.s32.totalorder %s14, 0
    %p77 = por %p75, %p76
    %p78 = scmp.ne.s32.totalorder %s66, %s67
    %p79 = scmp.eq.s32.totalorder %s15, 1
    %p80 = por %p78, %p79
    %p82 = scmp.ne.s32.totalorder %s67, %s81
    %p83 = scmp.eq.s32.totalorder %s15, 0
    %p84 = por %p82, %p83
    %s85 = ssub.s32 %s9, %s16
    %p86 = scmp.eq.s32.totalorder %s85, 0
    %s88 = sadd.s32 %s87, 1
    %s89 = scalar_select %p86, %s87, %s88
    %p92 = pneg %p86
    %p93 = scmp.eq.s32.totalorder %s9, 1
    %p94 = por %p92, %p93
    %p95 = scmp.ne.s32.totalorder %s87, %s90
    %p96 = scmp.eq.s32.totalorder %s9, 0
    %p97 = por %p95, %p96
    %p98 = scmp.ne.s32.totalorder %s87, %s90
    %p99 = scmp.eq.s32.totalorder %s14, 1
    %p100 = por %p98, %p99
    %p101 = scmp.ne.s32.totalorder %s90, %s91
    %p102 = scmp.eq.s32.totalorder %s14, 0
    %p103 = por %p101, %p102
    %p104 = scmp.ne.s32.totalorder %s90, %s91
    %p105 = scmp.eq.s32.totalorder %s15, 1
    %p106 = por %p104, %p105
    %p108 = scmp.ne.s32.totalorder %s91, %s107
    %p109 = scmp.eq.s32.totalorder %s15, 0
    %p110 = por %p108, %p109
    %p111 = scmp.le.s32.totalorder 1, %s9
    %p112 = scmp.lt.s32.totalorder %s9, 3
    %p113 = pnand %p111, %p112
    %p114 = pneg %p113
    // Predicated region
    $region9: #{_lambda_.6} parent=5 // pred_check
      _
    $region10: #{_lambda_.6} parent=5 // pred_check_branch
      %116 = sbr.rel (%p113) target = $region12
    $region11: #{_lambda_.6} parent=5 // pred_region
      %s117 = ssub.s32 %s9, 1
      // Predicated region
      $region13: #{_lambda_.6} parent=11 // pred_check
        %p118 = pneg %p56
      $region14: #{_lambda_.6} parent=11 // pred_check_branch
        %120 = sbr.rel (%p118) target = $region16
      $region15: #{_lambda_.6} parent=11 // pred_region
        _
      $region16: #{_lambda_.6} parent=11 // pred_fallthru
        _
      // Predicated region
      $region17: #{_lambda_.6} parent=11 // pred_check
        %p121 = pneg %p77
      $region18: #{_lambda_.6} parent=11 // pred_check_branch
        %123 = sbr.rel (%p121) target = $region20
      $region19: #{_lambda_.6} parent=11 // pred_region
        _
      $region20: #{_lambda_.6} parent=11 // pred_fallthru
        _
    $region12: #{_lambda_.6} parent=5 // pred_fallthru
      _
    %p124 = scmp.lt.s32.totalorder %s9, 2
    // Predicated region
    $region21: #{_lambda_.6} parent=5 // pred_check
      %p125 = pneg %p124
    $region22: #{_lambda_.6} parent=5 // pred_check_branch
      %127 = sbr.rel (%p125) target = $region24
    $region23: #{_lambda_.6} parent=5 // pred_region
      // Predicated region
      $region25: #{_lambda_.6} parent=23 // pred_check
        %p128 = pneg %p29
      $region26: #{_lambda_.6} parent=23 // pred_check_branch
        %130 = sbr.rel (%p128) target = $region28
      $region27: #{_lambda_.6} parent=23 // pred_region
        %p131 = scmp.lt.s32.totalorder %s9, 1
        %s132 = scalar_select %p131, %s9, 1
        %s133 = smul.addr %s132, 4
        %s134 = scalar_lea.vmem %s0, %s133
      $region28: #{_lambda_.6} parent=23 // pred_fallthru
        _
    $region24: #{_lambda_.6} parent=5 // pred_fallthru
      _
    %p135 = scmp.le.s32.totalorder 1, %s9
    %p136 = scmp.lt.s32.totalorder %s9, 3
    %p137 = pnand %p135, %p136
    %p138 = pneg %p137
    // Predicated region
    $region29: #{_lambda_.6} parent=5 // pred_check
      _
    $region30: #{_lambda_.6} parent=5 // pred_check_branch
      %140 = sbr.rel (%p137) target = $region32
    $region31: #{_lambda_.6} parent=5 // pred_region
      %s141 = ssub.s32 %s9, 1
      %p142 = scmp.lt.s32.totalorder %s14, 1
      %s143 = scalar_select %p142, %s14, 1
      %s144 = smul.addr %s143, 4
      %s145 = scalar_lea.vmem %s0, %s144
      %p146 = pneg %p35
      %p147 = pneg %p32
      %p148 = pneg %p56
      %p149 = pneg %p53
      %p150 = pneg %p77
      %p151 = pneg %p74
      %p152 = pneg %p103
      %p153 = pneg %p100
      %p154 = scmp.lt.s32.totalorder %s14, 1
      %s155 = scalar_select %p154, %s14, 1
      %s156 = smul.addr %s155, 4
      %s157 = scalar_lea.vmem %s3, %s156
      %p158 = scmp.lt.s32.totalorder %s14, 1
      %s159 = scalar_select %p158, %s14, 1
      %s160 = smul.addr %s159, 4
      %s161 = scalar_lea.vmem %s0, %s160
      %p162 = scmp.lt.s32.totalorder %s14, 1
      %s163 = scalar_select %p162, %s14, 1
      %s164 = smul.addr %s163, 4
      %s165 = scalar_lea.vmem %s3, %s164
      %v167 = vld [vmem:[%s161] sm:$0xf]
      %v168 = vunpack.c.l.bf16 %v167
      %v169 = vld [vmem:[%s1] sm:$0xff]
      %v170 = vld [vmem:[%s1 + $0x8] sm:$0xff]
      %v171 = vld [vmem:[%s1 + $0x10] sm:$0xff]
      %v172 = vld [vmem:[%s1 + $0x18] sm:$0xff]
      %v173 = vld [vmem:[%s1 + $0x20] sm:$0xff]
      %v174 = vld [vmem:[%s1 + $0x28] sm:$0xff]
      %v175 = vld [vmem:[%s1 + $0x30] sm:$0xff]
      %v176 = vld [vmem:[%s1 + $0x38] sm:$0xff]
      %v178 = vunpack.c.l.b16 %v167
      %v179 = vpack.c.b16 %v178, %v178
      %180 = vrot.lane.b32.xlu0 %v179, 64
      %v181 = vpop.permute.xlu0 %180
      %v190 = vunpack.c.l.b16 %v169
      %v191 = vunpack.c.h.b16 %v169
      %v192 = vunpack.c.l.b16 %v170
      %v193 = vunpack.c.h.b16 %v170
      %v194 = vunpack.c.l.b16 %v171
      %v195 = vunpack.c.h.b16 %v171
      %v196 = vunpack.c.l.b16 %v172
      %v197 = vunpack.c.h.b16 %v172
      %v198 = vunpack.c.l.b16 %v173
      %v199 = vunpack.c.h.b16 %v173
      %v200 = vunpack.c.l.b16 %v174
      %v201 = vunpack.c.h.b16 %v174
      %v202 = vunpack.c.l.b16 %v175
      %v203 = vunpack.c.h.b16 %v175
      %v204 = vunpack.c.l.b16 %v176
      %v205 = vunpack.c.h.b16 %v176
      %v206 = vpack.c.b16 %v192, %v190
      %v207 = vpack.c.b16 %v193, %v191
      %v208 = vpack.c.b16 %v196, %v194
      %v209 = vpack.c.b16 %v197, %v195
      %v210 = vpack.c.b16 %v200, %v198
      %v211 = vpack.c.b16 %v201, %v199
      %v212 = vpack.c.b16 %v204, %v202
      %v213 = vpack.c.b16 %v205, %v203
      %vm222 = vcmask 523264
      %v224 = vsel %vm222, %v181, 0
      %226 = vmatprep.subr.bf16.mxu0 %v207
      %227 = vmatpush1.bf16.msra.mxu0 %v206
      %228 = vmatprep.subr.bf16.mxu0 %v209
      %229 = vmatpush1.bf16.msra.mxu0 %v208
      %230 = vmatprep.subr.bf16.mxu0 %v211
      %231 = vmatpush1.bf16.msra.mxu0 %v210
      %232 = vmatprep.subr.bf16.mxu0 %v213
      %233 = vmatpush1.bf16.msra.mxu0 %v212
      %234 = vmatprep.subr.bf16.mxu0 0
      %235 = vmatpush1.bf16.msra.mxu0 0
      %236 = vmatprep.subr.bf16.mxu0 0
      %237 = vmatpush1.bf16.msra.mxu0 0
      %238 = vmatprep.subr.bf16.mxu0 0
      %239 = vmatpush1.bf16.msra.mxu0 0
      %240 = vmatprep.subr.bf16.mxu0 0
      %241 = vmatpush1.bf16.msra.mxu0 0
      %242 = vmatprep.subr.bf16.mxu0 0
      %243 = vmatpush1.bf16.msra.mxu0 0
      %244 = vmatprep.subr.bf16.mxu0 0
      %245 = vmatpush1.bf16.msra.mxu0 0
      %246 = vmatprep.subr.bf16.mxu0 0
      %247 = vmatpush1.bf16.msra.mxu0 0
      %248 = vmatprep.subr.bf16.mxu0 0
      %249 = vmatpush1.bf16.msra.mxu0 0
      %250 = vmatprep.subr.bf16.mxu0 0
      %251 = vmatpush1.bf16.msra.mxu0 0
      %252 = vmatprep.subr.bf16.mxu0 0
      %253 = vmatpush1.bf16.msra.mxu0 0
      %254 = vmatprep.subr.bf16.mxu0 0
      %255 = vmatpush1.bf16.msra.mxu0 0
      %256 = vmatprep.subr.bf16.mxu0 0
      %257 = vmatpush1.bf16.msra.mxu0 0
      %258 = vmatprep.mubr.bf16.mxu0 0
      %259 = vmatmul.mubr.bf16.gmra.mrb[0].mxu0 %v224
      %v260 = vpop.f32.mrb[0].mxu0
      %v261 = vadd.f32 0.0, %v260
      %v262 = vpop.f32.mrb[0].mxu0
      %v263 = vadd.f32 0.0, %v262
      %v264 = vpop.f32.mrb[0].mxu0
      %v265 = vpop.f32.mrb[0].mxu0
      %266 = vdwg.mxu0
      %v267 = vxor.u32 %v261, 2147483648
      %v268 = vmul.f32 %v267, 1.442695
      %v269 = vpow.pop %v268
      %v270 = vadd.f32 %v269, 1.0
      %v271 = vrcp.pop %v270
      %v272 = vmul.f32 1.0, %v271
      %v273 = vmul.f32 %v261, %v272
      %276 = vrot.lane.b32.xlu0 %v261, 32
      %v277 = vpop.permute.xlu0 %276
      %278 = vrot.lane.b32.xlu0 %v263, 32
      %v279 = vpop.permute.xlu0 %278
      %vm280 = vcmask 261120
      %v281 = vsel %vm280, %v277, %v279
      %v283 = vmul.f32 %v273, %v281
      %v284 = vpack.c.bf16 %v283, %v283
      %v285 = vld [vmem:[%s2] sm:$0xf]
      %v286 = vld [vmem:[%s2 + $0x4] sm:$0xf]
      %v287 = vld [vmem:[%s2 + $0x8] sm:$0xf]
      %v288 = vld [vmem:[%s2 + $0xc] sm:$0xf]
      %v289 = vld [vmem:[%s2 + $0x10] sm:$0xf]
      %v290 = vld [vmem:[%s2 + $0x14] sm:$0xf]
      %v291 = vld [vmem:[%s2 + $0x18] sm:$0xf]
      %v292 = vld [vmem:[%s2 + $0x1c] sm:$0xf]
      %v293 = vld [vmem:[%s2 + $0x20] sm:$0xf]
      %v294 = vld [vmem:[%s2 + $0x24] sm:$0xf]
      %v295 = vld [vmem:[%s2 + $0x28] sm:$0xf]
      %v296 = vld [vmem:[%s2 + $0x2c] sm:$0xf]
      %v309 = vunpack.c.l.b16 %v285
      %v310 = vunpack.c.l.b16 %v286
      %v311 = vunpack.c.l.b16 %v287
      %v312 = vunpack.c.l.b16 %v288
      %v313 = vunpack.c.l.b16 %v289
      %v314 = vunpack.c.l.b16 %v290
      %v315 = vunpack.c.l.b16 %v291
      %v316 = vunpack.c.l.b16 %v292
      %v317 = vunpack.c.l.b16 %v293
      %v318 = vunpack.c.l.b16 %v294
      %v319 = vunpack.c.l.b16 %v295
      %v320 = vunpack.c.l.b16 %v296
      %v321 = vpack.c.b16 %v310, %v309
      %v322 = vpack.c.b16 %v312, %v311
      %v323 = vpack.c.b16 %v314, %v313
      %v324 = vpack.c.b16 %v316, %v315
      %v325 = vpack.c.b16 %v318, %v317
      %v326 = vpack.c.b16 %v320, %v319
      %vm333 = vcmask 785408
      %v335 = vsel %vm333, %v284, 0
      %337 = vmatprep.subr.bf16.mxu0 0
      %338 = vmatpush1.bf16.msra.mxu0 %v321
      %339 = vmatprep.subr.bf16.mxu0 0
      %340 = vmatpush1.bf16.msra.mxu0 %v322
      %341 = vmatprep.subr.bf16.mxu0 0
      %342 = vmatpush1.bf16.msra.mxu0 %v323
      %343 = vmatprep.subr.bf16.mxu0 0
      %344 = vmatpush1.bf16.msra.mxu0 %v324
      %345 = vmatprep.subr.bf16.mxu0 0
      %346 = vmatpush1.bf16.msra.mxu0 %v325
      %347 = vmatprep.subr.bf16.mxu0 0
      %348 = vmatpush1.bf16.msra.mxu0 %v326
      %349 = vmatprep.subr.bf16.mxu0 0
      %350 = vmatpush1.bf16.msra.mxu0 0
      %351 = vmatprep.subr.bf16.mxu0 0
      %352 = vmatpush1.bf16.msra.mxu0 0
      %353 = vmatprep.subr.bf16.mxu0 0
      %354 = vmatpush1.bf16.msra.mxu0 0
      %355 = vmatprep.subr.bf16.mxu0 0
      %356 = vmatpush1.bf16.msra.mxu0 0
      %357 = vmatprep.subr.bf16.mxu0 0
      %358 = vmatpush1.bf16.msra.mxu0 0
      %359 = vmatprep.subr.bf16.mxu0 0
      %360 = vmatpush1.bf16.msra.mxu0 0
      %361 = vmatprep.subr.bf16.mxu0 0
      %362 = vmatpush1.bf16.msra.mxu0 0
      %363 = vmatprep.subr.bf16.mxu0 0
      %364 = vmatpush1.bf16.msra.mxu0 0
      %365 = vmatprep.subr.bf16.mxu0 0
      %366 = vmatpush1.bf16.msra.mxu0 0
      %367 = vmatprep.subr.bf16.mxu0 0
      %368 = vmatpush1.bf16.msra.mxu0 0
      %369 = vmatprep.mubr.bf16.mxu0 0
      %370 = vmatmul.mubr.bf16.gmra.mrb[0].mxu0 %v335
      %v371 = vpop.f32.mrb[0].mxu0
      %v372 = vadd.f32 0.0, %v371
      %v373 = vpop.f32.mrb[0].mxu0
      %v374 = vpop.f32.mrb[0].mxu0
      %v375 = vpop.f32.mrb[0].mxu0
      %376 = vdwg.mxu0
      %v377 = vadd.f32 %v168, %v372
      %v378 = vpack.c.bf16 %v377, %v377
      %vm379 = vcmask 519168
      %380 = vst.msk [vmem:[%s165] sm:$0xf] %vm379, %v378
      %p381 = scmp.lt.s32.totalorder %s14, 1
      %s382 = scalar_select %p381, %s14, 1
      %s383 = smul.addr %s382, 4
      %s384 = scalar_lea.vmem %s3, %s383
      // Predicated region
      $region33: #{_lambda_.6} parent=31 // pred_check
        %p385 = pneg %p100
      $region34: #{_lambda_.6} parent=31 // pred_check_branch
        %387 = sbr.rel (%p385) target = $region36
      $region35: #{_lambda_.6} parent=31 // pred_region
        _
      $region36: #{_lambda_.6} parent=31 // pred_fallthru
        _
    $region32: #{_lambda_.6} parent=5 // pred_fallthru
      _
    %p388 = scmp.le.s32.totalorder 2, %s9
    // Predicated region
    $region37: #{_lambda_.6} parent=5 // pred_check
      %p389 = pneg %p388
    $region38: #{_lambda_.6} parent=5 // pred_check_branch
      %391 = sbr.rel (%p389) target = $region40
    $region39: #{_lambda_.6} parent=5 // pred_region
      %s392 = ssub.s32 %s9, 2
      // Predicated region
      $region41: #{_lambda_.6} parent=39 // pred_check
        %p393 = pneg %p106
      $region42: #{_lambda_.6} parent=39 // pred_check_branch
        %395 = sbr.rel (%p393) target = $region44
      $region43: #{_lambda_.6} parent=39 // pred_region
        %p396 = scmp.lt.s32.totalorder %s15, 1
        %s397 = scalar_select %p396, %s15, 1
        %s398 = smul.addr %s397, 4
        %s399 = scalar_lea.vmem %s3, %s398
      $region44: #{_lambda_.6} parent=39 // pred_fallthru
        _
    $region40: #{_lambda_.6} parent=5 // pred_fallthru
      _
  $region6: #{_lambda_.6} parent=0 // loop_footer
    %s13 = sadd.s32 1, %s9
  $region7: #{_lambda_.6} parent=0 // loop_footer_branch
    %8 = sbr.rel target = $region3
  $region8: #{_lambda_.6} parent=0 // loop_exit
    _

// kernel: _lambda_.9
$region0: #{_lambda_.9}
  #allocation0 [shape = 'u32[]', space=smem, size = 0x4, offset = 0x4, fixed_abs, tag = 'smem constant byte address 0x4 - core index']
  #allocation1 [shape = 'u32[144,128]{1,0:T(1,128)}', space=vmem, size = 0x12000, scoped, tag = 'internal scratch']
  %s0 = inlined_call_operand.vmem [shape: bf16[2,64], index: 0, kind: input, shape index: {}]
  %s1 = inlined_call_operand.vmem [shape: f32[1,64], index: 1, kind: input, shape index: {}]
  %s2 = inlined_call_operand.vmem [shape: bf16[64,128], index: 2, kind: input, shape index: {}]
  %s3 = inlined_call_operand.hbm [shape: f32[2,128], index: 3, kind: output, shape index: {}]
  %s4 = sld [smem:[#allocation0]]
  $region22: #{_lambda_.9} parent=0
    _
  %s6 = ssub.s32 1, %s4
  %s7 = scalar_select 0, %s6, %s4
  $region1: #{_lambda_.9} parent=0
    #allocation2 [shape = 'u8[1024]{0}', space=vmem, size = 0x400, scoped, tag = 'output window, operand 0, single buffered']
    #allocation3 [shape = 's32[1]{0}', space=sflag, size = 0x4, scoped, tag = 'scoped memory for _lambda_.9']
    %8 = vsyncpa [#allocation3], 0
    // Predicated region
    $region2: #{_lambda_.9} parent=1 // pred_check
      _
    $region3: #{_lambda_.9} parent=1 // pred_check_branch
      %10 = sbr.rel (0) target = $region5
    $region4: #{_lambda_.9} parent=1 // pred_region
      _
    $region5: #{_lambda_.9} parent=1 // pred_fallthru
      _
    // Predicated region
    $region6: #{_lambda_.9} parent=1 // pred_check
      _
    $region7: #{_lambda_.9} parent=1 // pred_check_branch
      %12 = sbr.rel (0) target = $region9
    $region8: #{_lambda_.9} parent=1 // pred_region
      _
    $region9: #{_lambda_.9} parent=1 // pred_fallthru
      _
    // Predicated region
    $region10: #{_lambda_.9} parent=1 // pred_check
      _
    $region11: #{_lambda_.9} parent=1 // pred_check_branch
      %14 = sbr.rel (0) target = $region13
    $region12: #{_lambda_.9} parent=1 // pred_region
      _
    $region13: #{_lambda_.9} parent=1 // pred_fallthru
      _
    %v16 = vld [vmem:[%s0] sm:$0x1]
    %v17 = vunpack.c.l.bf16 %v16
    %v18 = vmul.f32 %v17, %v17
    %vm19 = vcmask 517120
    %v20 = vsel %vm19, %v18, 0.0
    %21 = vadd.xlane.f32.xlu0 %v20
    %v22 = vpop.xlane.xlu0 %21
    %v23 = vrcp.pop 64.0
    %v24 = vmul.f32 %v22, %v23
    %v25 = vadd.f32 %v24, 1e-06
    %v26 = vrsqrt.pop %v25
    %v27 = vmul.f32 %v17, %v26
    %v28 = vld [vmem:[%s1] sm:$0x1]
    %v30 = vlaneseq
    %v31 = vshrl.u32 %v30, 7
    %v32 = vsub.s32 0, %v31
    %v33 = vrot.slane %v28, %v32
    %v35 = vmul.f32 %v27, %v33
    %v36 = vpack.c.bf16 %v35, %v35
    %v37 = vld [vmem:[%s2] sm:$0xf]
    %v38 = vld [vmem:[%s2 + $0x4] sm:$0xf]
    %v39 = vld [vmem:[%s2 + $0x8] sm:$0xf]
    %v40 = vld [vmem:[%s2 + $0xc] sm:$0xf]
    %v41 = vld [vmem:[%s2 + $0x10] sm:$0xf]
    %v42 = vld [vmem:[%s2 + $0x14] sm:$0xf]
    %v43 = vld [vmem:[%s2 + $0x18] sm:$0xf]
    %v44 = vld [vmem:[%s2 + $0x1c] sm:$0xf]
    %v53 = vunpack.c.l.b16 %v37
    %v54 = vunpack.c.l.b16 %v38
    %v55 = vunpack.c.l.b16 %v39
    %v56 = vunpack.c.l.b16 %v40
    %v57 = vunpack.c.l.b16 %v41
    %v58 = vunpack.c.l.b16 %v42
    %v59 = vunpack.c.l.b16 %v43
    %v60 = vunpack.c.l.b16 %v44
    %v61 = vpack.c.b16 %v54, %v53
    %v62 = vpack.c.b16 %v56, %v55
    %v63 = vpack.c.b16 %v58, %v57
    %v64 = vpack.c.b16 %v60, %v59
    %vm69 = vcmask 523264
    %v71 = vsel %vm69, %v36, 0
    %73 = vmatprep.subr.bf16.mxu0 0
    %74 = vmatpush1.bf16.msra.mxu0 %v61
    %75 = vmatprep.subr.bf16.mxu0 0
    %76 = vmatpush1.bf16.msra.mxu0 %v62
    %77 = vmatprep.subr.bf16.mxu0 0
    %78 = vmatpush1.bf16.msra.mxu0 %v63
    %79 = vmatprep.subr.bf16.mxu0 0
    %80 = vmatpush1.bf16.msra.mxu0 %v64
    %81 = vmatprep.subr.bf16.mxu0 0
    %82 = vmatpush1.bf16.msra.mxu0 0
    %83 = vmatprep.subr.bf16.mxu0 0
    %84 = vmatpush1.bf16.msra.mxu0 0
    %85 = vmatprep.subr.bf16.mxu0 0
    %86 = vmatpush1.bf16.msra.mxu0 0
    %87 = vmatprep.subr.bf16.mxu0 0
    %88 = vmatpush1.bf16.msra.mxu0 0
    %89 = vmatprep.subr.bf16.mxu0 0
    %90 = vmatpush1.bf16.msra.mxu0 0
    %91 = vmatprep.subr.bf16.mxu0 0
    %92 = vmatpush1.bf16.msra.mxu0 0
    %93 = vmatprep.subr.bf16.mxu0 0
    %94 = vmatpush1.bf16.msra.mxu0 0
    %95 = vmatprep.subr.bf16.mxu0 0
    %96 = vmatpush1.bf16.msra.mxu0 0
    %97 = vmatprep.subr.bf16.mxu0 0
    %98 = vmatpush1.bf16.msra.mxu0 0
    %99 = vmatprep.subr.bf16.mxu0 0
    %100 = vmatpush1.bf16.msra.mxu0 0
    %101 = vmatprep.subr.bf16.mxu0 0
    %102 = vmatpush1.bf16.msra.mxu0 0
    %103 = vmatprep.subr.bf16.mxu0 0
    %104 = vmatpush1.bf16.msra.mxu0 0
    %105 = vmatprep.mubr.bf16.mxu0 0
    %106 = vmatmul.mubr.bf16.gmra.mrb[0].mxu0 %v71
    %v107 = vpop.f32.mrb[0].mxu0
    %v108 = vadd.f32 0.0, %v107
    %v109 = vpop.f32.mrb[0].mxu0
    %v110 = vpop.f32.mrb[0].mxu0
    %v111 = vpop.f32.mrb[0].mxu0
    %112 = vdwg.mxu0
    %113 = vst [vmem:[#allocation2] sm:$0x3] %v108
    // Predicated region
    $region14: #{_lambda_.9} parent=1 // pred_check
      _
    $region15: #{_lambda_.9} parent=1 // pred_check_branch
      %115 = sbr.rel (0) target = $region17
    $region16: #{_lambda_.9} parent=1 // pred_region
      %s117 = ssub.s32 32, 32
      %118 = vsyncadd [#allocation3], %s117
      %s120 = sshll.u32 [#allocation2], 4
      %s121 = int_to_ptr.vmem [resolvable:$true] %s120
      %123 = dma.vmem_to_hbm [thread:$0]  %s121, 32, %s3, [#allocation3]
    $region17: #{_lambda_.9} parent=1 // pred_fallthru
      _
    // Predicated region
    $region18: #{_lambda_.9} parent=1 // pred_check
      _
    $region19: #{_lambda_.9} parent=1 // pred_check_branch
      %125 = sbr.rel (0) target = $region21
    $region20: #{_lambda_.9} parent=1 // pred_region
      %126 = dma.done [#allocation3], 32
    $region21: #{_lambda_.9} parent=1 // pred_fallthru
      _
    %127 = vsyncpa [#allocation3], 1

// kernel: _lambda_.8
$region0: #{_lambda_.8}
  #allocation0 [shape = 'u32[]', space=smem, size = 0x4, offset = 0x4, fixed_abs, tag = 'smem constant byte address 0x4 - core index']
  #allocation1 [shape = 'u32[144,128]{1,0:T(1,128)}', space=vmem, size = 0x12000, scoped, tag = 'internal scratch']
  #allocation2 [shape = 'f32[8,64]{1,0:T(8,128)}', space=vmem, size = 0x1000, scoped, tag = 'scratch operand']
  #allocation3 [shape = 's32[1]{0}', space=sflag, size = 0x4, scoped, tag = 'scoped memory for _lambda_.8']
  #allocation4 [shape = 'u8[1024]{0}', space=smem, size = 0x400, scoped, tag = 'prefetched SMEM operand 0']
  %s0 = inlined_call_operand.vmem [shape: s32[2,5], index: 0, kind: input, shape index: {}]
  %s1 = inlined_call_operand.vmem [shape: bf16[16,128], index: 1, kind: input, shape index: {}]
  %s2 = inlined_call_operand.vmem [shape: bf16[5,64,64], index: 2, kind: input, shape index: {}]
  %s3 = inlined_call_operand.vmem [shape: bf16[5,32,64], index: 3, kind: input, shape index: {}]
  %s4 = inlined_call_operand.vmem [shape: f32[16,5], index: 4, kind: input, shape index: {}]
  %s5 = inlined_call_operand.vmem [shape: bf16[16,64], index: 5, kind: output, shape index: {}]
  %s6 = sld [smem:[#allocation0]]
  $region61: #{_lambda_.8} parent=0
    _
  %s8 = ssub.s32 1, %s6
  %s9 = scalar_select 0, %s8, %s6
  %s10 = sshll.u32 %s0, 4
  %s11 = int_to_ptr.vmem [resolvable:$true] %s10
  %13 = dma.vmem_to_smem %s11, 32, [#allocation4], [#allocation3]
  %14 = dma.done [#allocation3], 32
  %15 = sfence
  loop: start=0, step=1, limit=12
  $region2: #{_lambda_.8} parent=0 // loop_pre_header
    _
  $region3: #{_lambda_.8} parent=0 // loop_header
    %s17 = sphi 0, %s21
    %p18 = scmp.ge.s32.totalorder %s17, 12
    %s24 = sphi 0, %s36
    %s25 = sphi 0, %s32
    %s26 = sphi 0, %s24
    %s27 = sphi 0, %s25
    %s28 = sphi 0, %s26
    %s29 = sphi 0, %s27
    %s39 = sphi 0, %s41
    %s42 = sphi 0, %s39
    %s43 = sphi 0, %s42
    %s59 = sphi 0, %s43
    %s65 = sphi 0, %s67
    %s68 = sphi 0, %s65
    %s69 = sphi 0, %s68
    %s85 = sphi 0, %s69
    %s91 = sphi 0, %s93
    %s94 = sphi 0, %s91
    %s95 = sphi 0, %s94
    %s111 = sphi 0, %s95
    %s117 = sphi 0, %s119
    %s120 = sphi 0, %s117
    %s121 = sphi 0, %s120
    %s137 = sphi 0, %s121
    %s143 = sphi 0, %s145
    %s146 = sphi 0, %s143
    %s147 = sphi 0, %s146
    %s163 = sphi 0, %s147
  $region4: #{_lambda_.8} parent=0 // loop_header_branch
    %20 = sbr.rel (%p18) target = $region8
  $region5: #{_lambda_.8} parent=0 // loop_body
    %s22 = ssub.s32 %s17, 1
    %s23 = ssub.s32 %s17, 2
    %s30 = sadd.s32 1, %s25
    %p31 = scmp.ge.s32.totalorder %s30, 5
    %s32 = scalar_select %p31, 0, %s30
    %s33 = sadd.s32 1, %s24
    %s34 = scalar_select %p31, %s33, %s24
    %p35 = scmp.ge.s32.totalorder %s34, 2
    %s36 = scalar_select %p35, 0, %s34
    %s37 = ssub.s32 %s24, %s36
    %p38 = scmp.eq.s32.totalorder %s37, 0
    %s40 = sadd.s32 %s39, 1
    %s41 = scalar_select %p38, %s39, %s40
    %p44 = pneg %p38
    %p45 = scmp.eq.s32.totalorder %s17, 9
    %p46 = por %p44, %p45
    %p47 = scmp.ne.s32.totalorder %s39, %s42
    %p48 = scmp.eq.s32.totalorder %s17, 0
    %p49 = por %p47, %p48
    %p50 = scmp.ne.s32.totalorder %s39, %s42
    %p51 = scmp.eq.s32.totalorder %s22, 9
    %p52 = por %p50, %p51
    %p53 = scmp.ne.s32.totalorder %s42, %s43
    %p54 = scmp.eq.s32.totalorder %s22, 0
    %p55 = por %p53, %p54
    %p56 = scmp.ne.s32.totalorder %s42, %s43
    %p57 = scmp.eq.s32.totalorder %s23, 9
    %p58 = por %p56, %p57
    %p60 = scmp.ne.s32.totalorder %s43, %s59
    %p61 = scmp.eq.s32.totalorder %s23, 0
    %p62 = por %p60, %p61
    %s63 = ssub.s32 %s25, %s32
    %p64 = scmp.eq.s32.totalorder %s63, 0
    %s66 = sadd.s32 %s65, 1
    %s67 = scalar_select %p64, %s65, %s66
    %p70 = pneg %p64
    %p71 = scmp.eq.s32.totalorder %s17, 9
    %p72 = por %p70, %p71
    %p73 = scmp.ne.s32.totalorder %s65, %s68
    %p74 = scmp.eq.s32.totalorder %s17, 0
    %p75 = por %p73, %p74
    %p76 = scmp.ne.s32.totalorder %s65, %s68
    %p77 = scmp.eq.s32.totalorder %s22, 9
    %p78 = por %p76, %p77
    %p79 = scmp.ne.s32.totalorder %s68, %s69
    %p80 = scmp.eq.s32.totalorder %s22, 0
    %p81 = por %p79, %p80
    %p82 = scmp.ne.s32.totalorder %s68, %s69
    %p83 = scmp.eq.s32.totalorder %s23, 9
    %p84 = por %p82, %p83
    %p86 = scmp.ne.s32.totalorder %s69, %s85
    %p87 = scmp.eq.s32.totalorder %s23, 0
    %p88 = por %p86, %p87
    %s89 = ssub.s32 %s25, %s32
    %p90 = scmp.eq.s32.totalorder %s89, 0
    %s92 = sadd.s32 %s91, 1
    %s93 = scalar_select %p90, %s91, %s92
    %p96 = pneg %p90
    %p97 = scmp.eq.s32.totalorder %s17, 9
    %p98 = por %p96, %p97
    %p99 = scmp.ne.s32.totalorder %s91, %s94
    %p100 = scmp.eq.s32.totalorder %s17, 0
    %p101 = por %p99, %p100
    %p102 = scmp.ne.s32.totalorder %s91, %s94
    %p103 = scmp.eq.s32.totalorder %s22, 9
    %p104 = por %p102, %p103
    %p105 = scmp.ne.s32.totalorder %s94, %s95
    %p106 = scmp.eq.s32.totalorder %s22, 0
    %p107 = por %p105, %p106
    %p108 = scmp.ne.s32.totalorder %s94, %s95
    %p109 = scmp.eq.s32.totalorder %s23, 9
    %p110 = por %p108, %p109
    %p112 = scmp.ne.s32.totalorder %s95, %s111
    %p113 = scmp.eq.s32.totalorder %s23, 0
    %p114 = por %p112, %p113
    %s115 = ssub.s32 %s24, %s36
    %p116 = scmp.eq.s32.totalorder %s115, 0
    %s118 = sadd.s32 %s117, 1
    %s119 = scalar_select %p116, %s117, %s118
    %p122 = pneg %p116
    %p123 = scmp.eq.s32.totalorder %s17, 9
    %p124 = por %p122, %p123
    %p125 = scmp.ne.s32.totalorder %s117, %s120
    %p126 = scmp.eq.s32.totalorder %s17, 0
    %p127 = por %p125, %p126
    %p128 = scmp.ne.s32.totalorder %s117, %s120
    %p129 = scmp.eq.s32.totalorder %s22, 9
    %p130 = por %p128, %p129
    %p131 = scmp.ne.s32.totalorder %s120, %s121
    %p132 = scmp.eq.s32.totalorder %s22, 0
    %p133 = por %p131, %p132
    %p134 = scmp.ne.s32.totalorder %s120, %s121
    %p135 = scmp.eq.s32.totalorder %s23, 9
    %p136 = por %p134, %p135
    %p138 = scmp.ne.s32.totalorder %s121, %s137
    %p139 = scmp.eq.s32.totalorder %s23, 0
    %p140 = por %p138, %p139
    %s141 = ssub.s32 %s24, %s36
    %p142 = scmp.eq.s32.totalorder %s141, 0
    %s144 = sadd.s32 %s143, 1
    %s145 = scalar_select %p142, %s143, %s144
    %p148 = pneg %p142
    %p149 = scmp.eq.s32.totalorder %s17, 9
    %p150 = por %p148, %p149
    %p151 = scmp.ne.s32.totalorder %s143, %s146
    %p152 = scmp.eq.s32.totalorder %s17, 0
    %p153 = por %p151, %p152
    %p154 = scmp.ne.s32.totalorder %s143, %s146
    %p155 = scmp.eq.s32.totalorder %s22, 9
    %p156 = por %p154, %p155
    %p157 = scmp.ne.s32.totalorder %s146, %s147
    %p158 = scmp.eq.s32.totalorder %s22, 0
    %p159 = por %p157, %p158
    %p160 = scmp.ne.s32.totalorder %s146, %s147
    %p161 = scmp.eq.s32.totalorder %s23, 9
    %p162 = por %p160, %p161
    %p164 = scmp.ne.s32.totalorder %s147, %s163
    %p165 = scmp.eq.s32.totalorder %s23, 0
    %p166 = por %p164, %p165
    %p167 = scmp.le.s32.totalorder 1, %s17
    %p168 = scmp.lt.s32.totalorder %s17, 11
    %p169 = pnand %p167, %p168
    %p170 = pneg %p169
    // Predicated region
    $region9: #{_lambda_.8} parent=5 // pred_check
      _
    $region10: #{_lambda_.8} parent=5 // pred_check_branch
      %172 = sbr.rel (%p169) target = $region12
    $region11: #{_lambda_.8} parent=5 // pred_region
      %s173 = ssub.s32 %s17, 1
    $region12: #{_lambda_.8} parent=5 // pred_fallthru
      _
    %p174 = scmp.lt.s32.totalorder %s17, 10
    // Predicated region
    $region13: #{_lambda_.8} parent=5 // pred_check
      %p175 = pneg %p174
    $region14: #{_lambda_.8} parent=5 // pred_check_branch
      %177 = sbr.rel (%p175) target = $region16
    $region15: #{_lambda_.8} parent=5 // pred_region
      // Predicated region
      $region17: #{_lambda_.8} parent=15 // pred_check
        %p178 = pneg %p49
      $region18: #{_lambda_.8} parent=15 // pred_check_branch
        %180 = sbr.rel (%p178) target = $region20
      $region19: #{_lambda_.8} parent=15 // pred_region
        %p181 = scmp.lt.s32.totalorder %s24, 1
        %s182 = scalar_select %p181, %s24, 1
        %s183 = smul.addr %s182, 4
        %s184 = scalar_lea.vmem %s1, %s183
      $region20: #{_lambda_.8} parent=15 // pred_fallthru
        _
      // Predicated region
      $region21: #{_lambda_.8} parent=15 // pred_check
        %p185 = pneg %p75
      $region22: #{_lambda_.8} parent=15 // pred_check_branch
        %187 = sbr.rel (%p185) target = $region24
      $region23: #{_lambda_.8} parent=15 // pred_region
        %p188 = scmp.lt.s32.totalorder %s25, 4
        %s189 = scalar_select %p188, %s25, 4
        %s190 = smul.addr %s189, 8
        %s191 = smul.addr %s190, 4
        %s192 = scalar_lea.vmem %s2, %s191
      $region24: #{_lambda_.8} parent=15 // pred_fallthru
        _
      // Predicated region
      $region25: #{_lambda_.8} parent=15 // pred_check
        %p193 = pneg %p101
      $region26: #{_lambda_.8} parent=15 // pred_check_branch
        %195 = sbr.rel (%p193) target = $region28
      $region27: #{_lambda_.8} parent=15 // pred_region
        %p196 = scmp.lt.s32.totalorder %s25, 4
        %s197 = scalar_select %p196, %s25, 4
        %s198 = smul.addr %s197, 4
        %s199 = smul.addr %s198, 4
        %s200 = scalar_lea.vmem %s3, %s199
      $region28: #{_lambda_.8} parent=15 // pred_fallthru
        _
      // Predicated region
      $region29: #{_lambda_.8} parent=15 // pred_check
        %p201 = pneg %p127
      $region30: #{_lambda_.8} parent=15 // pred_check_branch
        %203 = sbr.rel (%p201) target = $region32
      $region31: #{_lambda_.8} parent=15 // pred_region
        %p204 = scmp.lt.s32.totalorder %s24, 1
        %s205 = scalar_select %p204, %s24, 1
        %s206 = smul.addr %s205, 8
        %s207 = scalar_lea.vmem %s4, %s206
      $region32: #{_lambda_.8} parent=15 // pred_fallthru
        _
    $region16: #{_lambda_.8} parent=5 // pred_fallthru
      _
    %p208 = scmp.le.s32.totalorder 1, %s17
    %p209 = scmp.lt.s32.totalorder %s17, 11
    %p210 = pnand %p208, %p209
    %p211 = pneg %p210
    // Predicated region
    $region33: #{_lambda_.8} parent=5 // pred_check
      _
    $region34: #{_lambda_.8} parent=5 // pred_check_branch
      %213 = sbr.rel (%p210) target = $region36
    $region35: #{_lambda_.8} parent=5 // pred_region
      %s214 = ssub.s32 %s17, 1
      %p215 = scmp.lt.s32.totalorder %s26, 1
      %s216 = scalar_select %p215, %s26, 1
      %s217 = smul.addr %s216, 4
      %s218 = scalar_lea.vmem %s1, %s217
      %p219 = pneg %p55
      %p220 = pneg %p52
      %p221 = scmp.lt.s32.totalorder %s27, 4
      %s222 = scalar_select %p221, %s27, 4
      %s223 = smul.addr %s222, 8
      %s224 = smul.addr %s223, 4
      %s225 = scalar_lea.vmem %s2, %s224
      %p226 = pneg %p81
      %p227 = pneg %p78
      %p228 = scmp.lt.s32.totalorder %s27, 4
      %s229 = scalar_select %p228, %s27, 4
      %s230 = smul.addr %s229, 4
      %s231 = smul.addr %s230, 4
      %s232 = scalar_lea.vmem %s3, %s231
      %p233 = pneg %p107
      %p234 = pneg %p104
      %p235 = scmp.lt.s32.totalorder %s26, 1
      %s236 = scalar_select %p235, %s26, 1
      %s237 = smul.addr %s236, 8
      %s238 = scalar_lea.vmem %s4, %s237
      %p239 = pneg %p133
      %p240 = pneg %p130
      %p241 = pneg %p159
      %p242 = pneg %p156
      %p243 = scmp.lt.s32.totalorder %s26, 1
      %s244 = scalar_select %p243, %s26, 1
      %s245 = smul.addr %s244, 4
      %s246 = scalar_lea.vmem %s5, %s245
      %p247 = scmp.lt.s32.totalorder %s26, 1
      %s248 = scalar_select %p247, %s26, 1
      %s249 = smul.addr %s248, 4
      %s250 = scalar_lea.vmem %s1, %s249
      %p251 = scmp.lt.s32.totalorder %s27, 4
      %s252 = scalar_select %p251, %s27, 4
      %s253 = smul.addr %s252, 8
      %s254 = smul.addr %s253, 4
      %s255 = scalar_lea.vmem %s2, %s254
      %p256 = scmp.lt.s32.totalorder %s27, 4
      %s257 = scalar_select %p256, %s27, 4
      %s258 = smul.addr %s257, 4
      %s259 = smul.addr %s258, 4
      %s260 = scalar_lea.vmem %s3, %s259
      %p261 = scmp.lt.s32.totalorder %s26, 1
      %s262 = scalar_select %p261, %s26, 1
      %s263 = smul.addr %s262, 8
      %s264 = scalar_lea.vmem %s4, %s263
      %p265 = scmp.lt.s32.totalorder %s26, 1
      %s266 = scalar_select %p265, %s26, 1
      %s267 = smul.addr %s266, 4
      %s268 = scalar_lea.vmem %s5, %s267
      %p270 = scmp.eq.s32.totalorder %s27, 0
      // Predicated region
      $region37: #{_lambda_.8} parent=35 // pred_check
        %p271 = pneg %p270
      $region38: #{_lambda_.8} parent=35 // pred_check_branch
        %273 = sbr.rel (%p271) target = $region40
      $region39: #{_lambda_.8} parent=35 // pred_region
        %v274 = vld [vmem:[%s250] sm:$0xf]
        %v275 = vunpack.c.l.bf16 %v274
        %vm276 = vcmask 523264
        %277 = vst.msk [vmem:[#allocation2] sm:$0xff] %vm276, %v275
      $region40: #{_lambda_.8} parent=35 // pred_fallthru
        _
      %s278 = sshra.s32 %s27, 7
      %s279 = sand.u32 %s27, 127
      %s280 = sadd.s32 %s278, %s26
      %s281 = smul.u32 %s280, 128
      %s282 = sshra.s32 %s27, 7
      %s283 = sand.u32 %s27, 127
      %s284 = sadd.s32 %s281, %s283
      %s285 = sld [smem:[#allocation4 + %s284]]
      %p286 = scmp.gt.s32.totalorder %s285, 0
      // Predicated region
      $region41: #{_lambda_.8} parent=35 // pred_check
        %p287 = pneg %p286
      $region42: #{_lambda_.8} parent=35 // pred_check_branch
        %289 = sbr.rel (%p287) target = $region44
      $region43: #{_lambda_.8} parent=35 // pred_region
        %v290 = vld [vmem:[%s250] sm:$0xf]
        %v291 = vld [vmem:[%s255] sm:$0xf]
        %v292 = vld [vmem:[%s255 + $0x4] sm:$0xf]
        %v293 = vld [vmem:[%s255 + $0x8] sm:$0xf]
        %v294 = vld [vmem:[%s255 + $0xc] sm:$0xf]
        %v295 = vld [vmem:[%s255 + $0x10] sm:$0xf]
        %v296 = vld [vmem:[%s255 + $0x14] sm:$0xf]
        %v297 = vld [vmem:[%s255 + $0x18] sm:$0xf]
        %v298 = vld [vmem:[%s255 + $0x1c] sm:$0xf]
        %v300 = vunpack.c.l.b16 %v290
        %v301 = vpack.c.b16 %v300, %v300
        %302 = vrot.lane.b32.xlu0 %v301, 64
        %v303 = vpop.permute.xlu0 %302
        %v312 = vunpack.c.l.b16 %v291
        %v313 = vunpack.c.l.b16 %v292
        %v314 = vunpack.c.l.b16 %v293
        %v315 = vunpack.c.l.b16 %v294
        %v316 = vunpack.c.l.b16 %v295
        %v317 = vunpack.c.l.b16 %v296
        %v318 = vunpack.c.l.b16 %v297
        %v319 = vunpack.c.l.b16 %v298
        %v320 = vpack.c.b16 %v313, %v312
        %v321 = vpack.c.b16 %v315, %v314
        %v322 = vpack.c.b16 %v317, %v316
        %v323 = vpack.c.b16 %v319, %v318
        %vm328 = vcmask 523264
        %v330 = vsel %vm328, %v303, 0
        %332 = vmatprep.subr.bf16.mxu0 0
        %333 = vmatpush1.bf16.msra.mxu0 %v320
        %334 = vmatprep.subr.bf16.mxu0 0
        %335 = vmatpush1.bf16.msra.mxu0 %v321
        %336 = vmatprep.subr.bf16.mxu0 0
        %337 = vmatpush1.bf16.msra.mxu0 %v322
        %338 = vmatprep.subr.bf16.mxu0 0
        %339 = vmatpush1.bf16.msra.mxu0 %v323
        %340 = vmatprep.subr.bf16.mxu0 0
        %341 = vmatpush1.bf16.msra.mxu0 0
        %342 = vmatprep.subr.bf16.mxu0 0
        %343 = vmatpush1.bf16.msra.mxu0 0
        %344 = vmatprep.subr.bf16.mxu0 0
        %345 = vmatpush1.bf16.msra.mxu0 0
        %346 = vmatprep.subr.bf16.mxu0 0
        %347 = vmatpush1.bf16.msra.mxu0 0
        %348 = vmatprep.subr.bf16.mxu0 0
        %349 = vmatpush1.bf16.msra.mxu0 0
        %350 = vmatprep.subr.bf16.mxu0 0
        %351 = vmatpush1.bf16.msra.mxu0 0
        %352 = vmatprep.subr.bf16.mxu0 0
        %353 = vmatpush1.bf16.msra.mxu0 0
        %354 = vmatprep.subr.bf16.mxu0 0
        %355 = vmatpush1.bf16.msra.mxu0 0
        %356 = vmatprep.subr.bf16.mxu0 0
        %357 = vmatpush1.bf16.msra.mxu0 0
        %358 = vmatprep.subr.bf16.mxu0 0
        %359 = vmatpush1.bf16.msra.mxu0 0
        %360 = vmatprep.subr.bf16.mxu0 0
        %361 = vmatpush1.bf16.msra.mxu0 0
        %362 = vmatprep.subr.bf16.mxu0 0
        %363 = vmatpush1.bf16.msra.mxu0 0
        %364 = vmatprep.mubr.bf16.mxu0 0
        %365 = vmatmul.mubr.bf16.gmra.mrb[0].mxu0 %v330
        %v366 = vpop.f32.mrb[0].mxu0
        %v367 = vadd.f32 0.0, %v366
        %v368 = vpop.f32.mrb[0].mxu0
        %v369 = vpop.f32.mrb[0].mxu0
        %v370 = vpop.f32.mrb[0].mxu0
        %371 = vdwg.mxu0
        %v372 = vxor.u32 %v367, 2147483648
        %v373 = vmul.f32 %v372, 1.442695
        %v374 = vpow.pop %v373
        %v375 = vadd.f32 %v374, 1.0
        %v376 = vrcp.pop %v375
        %v377 = vmul.f32 1.0, %v376
        %v378 = vmul.f32 %v367, %v377
        %380 = vrot.lane.b32.xlu0 %v367, 96
        %v381 = vpop.permute.xlu0 %380
        %v383 = vmul.f32 %v378, %v381
        %v384 = vpack.c.bf16 %v383, %v383
        %v385 = vld [vmem:[%s260] sm:$0xf]
        %v386 = vld [vmem:[%s260 + $0x4] sm:$0xf]
        %v387 = vld [vmem:[%s260 + $0x8] sm:$0xf]
        %v388 = vld [vmem:[%s260 + $0xc] sm:$0xf]
        %v393 = vunpack.c.l.b16 %v385
        %v394 = vunpack.c.l.b16 %v386
        %v395 = vunpack.c.l.b16 %v387
        %v396 = vunpack.c.l.b16 %v388
        %v397 = vpack.c.b16 %v394, %v393
        %v398 = vpack.c.b16 %v396, %v395
        %vm401 = vcmask 261120
        %v403 = vsel %vm401, %v384, 0
        %405 = vmatprep.subr.bf16.mxu0 0
        %406 = vmatpush1.bf16.msra.mxu0 %v397
        %407 = vmatprep.subr.bf16.mxu0 0
        %408 = vmatpush1.bf16.msra.mxu0 %v398
        %409 = vmatprep.subr.bf16.mxu0 0
        %410 = vmatpush1.bf16.msra.mxu0 0
        %411 = vmatprep.subr.bf16.mxu0 0
        %412 = vmatpush1.bf16.msra.mxu0 0
        %413 = vmatprep.subr.bf16.mxu0 0
        %414 = vmatpush1.bf16.msra.mxu0 0
        %415 = vmatprep.subr.bf16.mxu0 0
        %416 = vmatpush1.bf16.msra.mxu0 0
        %417 = vmatprep.subr.bf16.mxu0 0
        %418 = vmatpush1.bf16.msra.mxu0 0
        %419 = vmatprep.subr.bf16.mxu0 0
        %420 = vmatpush1.bf16.msra.mxu0 0
        %421 = vmatprep.subr.bf16.mxu0 0
        %422 = vmatpush1.bf16.msra.mxu0 0
        %423 = vmatprep.subr.bf16.mxu0 0
        %424 = vmatpush1.bf16.msra.mxu0 0
        %425 = vmatprep.subr.bf16.mxu0 0
        %426 = vmatpush1.bf16.msra.mxu0 0
        %427 = vmatprep.subr.bf16.mxu0 0
        %428 = vmatpush1.bf16.msra.mxu0 0
        %429 = vmatprep.subr.bf16.mxu0 0
        %430 = vmatpush1.bf16.msra.mxu0 0
        %431 = vmatprep.subr.bf16.mxu0 0
        %432 = vmatpush1.bf16.msra.mxu0 0
        %433 = vmatprep.subr.bf16.mxu0 0
        %434 = vmatpush1.bf16.msra.mxu0 0
        %435 = vmatprep.subr.bf16.mxu0 0
        %436 = vmatpush1.bf16.msra.mxu0 0
        %437 = vmatprep.mubr.bf16.mxu0 0
        %438 = vmatmul.mubr.bf16.gmra.mrb[0].mxu0 %v403
        %v439 = vpop.f32.mrb[0].mxu0
        %v440 = vadd.f32 0.0, %v439
        %v441 = vpop.f32.mrb[0].mxu0
        %v442 = vpop.f32.mrb[0].mxu0
        %v443 = vpop.f32.mrb[0].mxu0
        %444 = vdwg.mxu0
        %v445 = vlaneseq
        %v446 = vand.u32 %v445, 127
        %v447 = vstv %s27
        %vm448 = vcmp.eq.s32.totalorder %v446, %v447
        %v449 = vld [vmem:[%s264] sm:$0xff]
        %v450 = vsel %vm448, %v449, 0.0
        %vm451 = vcmask 39936
        %v452 = vsel %vm451, %v450, 0.0
        %453 = vadd.xlane.f32.xlu0 %v452
        %v454 = vpop.xlane.xlu0 %453
        %v455 = vld [vmem:[#allocation2] sm:$0xff]
        %v456 = vmul.f32 %v440, %v454
        %v457 = vadd.f32 %v455, %v456
        %458 = vst.msk [vmem:[#allocation2] sm:$0xff] %vm328, %v457
      $region44: #{_lambda_.8} parent=35 // pred_fallthru
        _
      %p459 = scmp.eq.s32.totalorder %s27, 4
      // Predicated region
      $region45: #{_lambda_.8} parent=35 // pred_check
        %p460 = pneg %p459
      $region46: #{_lambda_.8} parent=35 // pred_check_branch
        %462 = sbr.rel (%p460) target = $region48
      $region47: #{_lambda_.8} parent=35 // pred_region
        %v463 = vld [vmem:[#allocation2] sm:$0xff]
        %v464 = vpack.c.bf16 %v463, %v463
        %vm465 = vcmask 519168
        %466 = vst.msk [vmem:[%s268] sm:$0xf] %vm465, %v464
      $region48: #{_lambda_.8} parent=35 // pred_fallthru
        _
      %p467 = scmp.lt.s32.totalorder %s26, 1
      %s468 = scalar_select %p467, %s26, 1
      %s469 = smul.addr %s468, 4
      %s470 = scalar_lea.vmem %s5, %s469
      // Predicated region
      $region49: #{_lambda_.8} parent=35 // pred_check
        %p471 = pneg %p156
      $region50: #{_lambda_.8} parent=35 // pred_check_branch
        %473 = sbr.rel (%p471) target = $region52
      $region51: #{_lambda_.8} parent=35 // pred_region
        _
      $region52: #{_lambda_.8} parent=35 // pred_fallthru
        _
    $region36: #{_lambda_.8} parent=5 // pred_fallthru
      _
    %p474 = scmp.le.s32.totalorder 2, %s17
    // Predicated region
    $region53: #{_lambda_.8} parent=5 // pred_check
      %p475 = pneg %p474
    $region54: #{_lambda_.8} parent=5 // pred_check_branch
      %477 = sbr.rel (%p475) target = $region56
    $region55: #{_lambda_.8} parent=5 // pred_region
      %s478 = ssub.s32 %s17, 2
      // Predicated region
      $region57: #{_lambda_.8} parent=55 // pred_check
        %p479 = pneg %p162
      $region58: #{_lambda_.8} parent=55 // pred_check_branch
        %481 = sbr.rel (%p479) target = $region60
      $region59: #{_lambda_.8} parent=55 // pred_region
        %p482 = scmp.lt.s32.totalorder %s28, 1
        %s483 = scalar_select %p482, %s28, 1
        %s484 = smul.addr %s483, 4
        %s485 = scalar_lea.vmem %s5, %s484
      $region60: #{_lambda_.8} parent=55 // pred_fallthru
        _
    $region56: #{_lambda_.8} parent=5 // pred_fallthru
      _
  $region6: #{_lambda_.8} parent=0 // loop_footer
    %s21 = sadd.s32 1, %s17
  $region7: #{_lambda_.8} parent=0 // loop_footer_branch
    %16 = sbr.rel target = $region3
  $region8: #{_lambda_.8} parent=0 // loop_exit
    _

</llo_original>
